<compile_context>
chip_gen: v5e
topology: v5e:2x2
jax: 0.10.0
libtpu: 0.0.40
codegen_flags: <defaults>
</compile_context>

<pallas_src>
import functools

import jax
import jax.numpy as jnp
from jax.experimental import pallas as pl
from jax.experimental.pallas import tpu as pltpu


def _round_up(x, m):
    return -(-x // m) * m


def _bilstm_kernel(x_ref, lidx_ref, wih_ref, whh_ref, b_ref,
                   pooled_ref, special_ref,
                   xp_ref, h_ref, c_ref,
                   *, true_len, pad_len, chunk, unroll):
    """Grid = (direction, time-chunk).  One grid step = `chunk` timesteps of
    one direction.  h/c persist in VMEM scratch across the chunk axis; the
    pooled-max and the special readout (h at t=0 for forward, h at t=len-1
    for backward) accumulate directly in the direction-indexed output refs."""
    d = pl.program_id(0)          # 0 = forward direction, 1 = backward
    cidx = pl.program_id(1)       # chunk index along the (arbitrary) time axis
    Bp, Hp = h_ref.shape
    is_bwd = d == 1

    @pl.when(cidx == 0)
    def _init():
        zero = jnp.zeros((Bp, Hp), jnp.float32)
        h_ref[...] = zero
        c_ref[...] = zero
        special_ref[...] = zero
        pooled_ref[...] = jnp.full((Bp, Hp), -jnp.inf, jnp.float32)

    # Hoisted input projection for the whole chunk: one (chunk*Bp, Dp) matmul
    # instead of `chunk` tiny (Bp, Dp) matmuls inside the serial recurrence.
    xp_ref[...] = jnp.dot(x_ref[...], wih_ref[...],
                          preferred_element_type=jnp.float32)

    bias = b_ref[...]                                    # (1, 4Hp) f32
    lidx = lidx_ref[...]                                 # (Bp, 1) int32
    # Special readout target: t == 0 for forward, t == lengths-1 for backward.
    target = jnp.where(is_bwd, lidx, jnp.zeros_like(lidx))
    t0 = cidx * chunk

    def step(i, carry):
        h, c_state, pooled, special = carry
        # Forward walks t = t0+i; backward walks pad_len-1-(t0+i).  The x block
        # for backward is block nc-1-c, so within the chunk the backward step i
        # sits at row offset (chunk-1-i)*Bp.
        t_fwd = t0 + i
        t = jnp.where(is_bwd, pad_len - 1 - t_fwd, t_fwd)
        row = pl.multiple_of(jnp.where(is_bwd, chunk - 1 - i, i) * Bp, Bp)
        xp = xp_ref[pl.ds(row, Bp), :]                   # (Bp, 4Hp) f32
        gates = (xp
                 + jnp.dot(h.astype(jnp.bfloat16), whh_ref[...],
                           preferred_element_type=jnp.float32)
                 + bias)
        # PyTorch gate order (i, f, g, o); Hp multiple of 128 -> lane-aligned.
        ig = jax.nn.sigmoid(gates[:, 0 * Hp:1 * Hp])
        fg = jax.nn.sigmoid(gates[:, 1 * Hp:2 * Hp])
        gg = jnp.tanh(gates[:, 2 * Hp:3 * Hp])
        og = jax.nn.sigmoid(gates[:, 3 * Hp:4 * Hp])
        c_new = fg * c_state + ig * gg
        h_new = og * jnp.tanh(c_new)
        valid = t < true_len
        # Freeze state on padded timesteps (the backward direction sees the
        # padded tail FIRST) and keep them out of the pooled max.
        h = jnp.where(valid, h_new, h)
        c_state = jnp.where(valid, c_new, c_state)
        pooled = jnp.where(valid, jnp.maximum(pooled, h_new), pooled)
        special = jnp.where(target == t, h_new, special)
        return h, c_state, pooled, special

    carry0 = (h_ref[...], c_ref[...], pooled_ref[...], special_ref[...])
    h, c_state, pooled, special = jax.lax.fori_loop(
        0, chunk, step, carry0, unroll=unroll)

    h_ref[...] = h
    c_ref[...] = c_state
    pooled_ref[...] = pooled
    special_ref[...] = special


def _pad_gates(w, rows_pad, H, Hp, dtype):
    """(rows, 4H) gate-major matrix -> (rows_pad, 4Hp) with gate k at k*Hp."""
    rows = w.shape[0]
    out = jnp.zeros((rows_pad, 4 * Hp), dtype)
    for k in range(4):
        out = out.at[:rows, k * Hp:k * Hp + H].set(
            w[:, k * H:(k + 1) * H].astype(dtype))
    return out


def _vmem_budget_bytes(Tc, Bp, Dp, Hp):
    """Explicit scoped-VMEM budget: actual resident buffers + headroom."""
    x_stream = 2 * (Tc * Bp) * Dp * 2                    # double-buffered bf16 chunk
    weights = 2 * (Dp * 4 * Hp * 2 + Hp * 4 * Hp * 2 + 8 * 4 * Hp * 4)
    lidx = 2 * Bp * 128 * 4                              # lane-padded int32
    outs = 2 * 2 * Bp * Hp * 4
    scratch = (Tc * Bp) * 4 * Hp * 4 + 2 * Bp * Hp * 4
    need = x_stream + weights + lidx + outs + scratch
    return min(max(int(need * 1.5) + (4 << 20), 32 << 20), 96 << 20)


def bilstm_readouts(embed_btd, lengths_idx, params, *, max_chunk=32):
    """Bidirectional LSTM with in-kernel readouts.

    Returns (pool_f, pool_b, h0_f, hlast_b), each (B, H) float32:
      pool_f/pool_b : max over time of forward / backward outputs
      h0_f          : forward output at t = 0
      hlast_b       : backward output at t = lengths_idx[b]
    """
    B, T, D = embed_btd.shape
    H = params["whh_f"].shape[0]
    Hp = _round_up(H, 128)
    Dp = _round_up(D, 128)
    Bp = _round_up(B, 8)
    max_chunk = _round_up(max_chunk, 8)
    Tc = min(max_chunk, _round_up(T, 8))                 # chunk, multiple of 8
    Tp = _round_up(T, Tc)                                # padded (masked) length
    num_chunks = Tp // Tc
    unroll = min(Tc, 8)

    # TODO(synk): the (B,T,D)->(Tp*Bp,Dp) transpose+pad+cast is an extra HBM
    # round-trip in XLA; feed the encoder time-major bf16 upstream to avoid it.
    x_tbd = jnp.transpose(embed_btd, (1, 0, 2))
    x_pad = jnp.zeros((Tp, Bp, Dp), jnp.bfloat16)
    x_pad = x_pad.at[:T, :B, :D].set(x_tbd.astype(jnp.bfloat16))
    x_flat = x_pad.reshape(Tp * Bp, Dp)                  # row = t*Bp + b

    lidx = jnp.full((Bp, 1), -1, jnp.int32)              # -1 never matches
    lidx = lidx.at[:B, 0].set(lengths_idx.astype(jnp.int32))

    bf16 = jnp.bfloat16
    wih = jnp.stack([_pad_gates(params["wih_f"], Dp, H, Hp, bf16),
                     _pad_gates(params["wih_b"], Dp, H, Hp, bf16)])
    whh = jnp.stack([_pad_gates(params["whh_f"], Hp, H, Hp, bf16),
                     _pad_gates(params["whh_b"], Hp, H, Hp, bf16)])
    bias = jnp.stack([_pad_gates(params["b_f"], 1, H, Hp, jnp.float32),
                      _pad_gates(params["b_b"], 1, H, Hp, jnp.float32)])

    # forward reads x block c, backward reads block nc-1-c (same array).
    x_map = lambda d, c: (c + d * (num_chunks - 1 - 2 * c), 0)
    dir_map3 = lambda d, c: (d, 0, 0)
    const2 = lambda d, c: (0, 0)

    grid_spec = pltpu.PrefetchScalarGridSpec(
        num_scalar_prefetch=0,
        grid=(2, num_chunks),                            # (direction, time-chunk)
        in_specs=[
            pl.BlockSpec((Tc * Bp, Dp), x_map),          # streamed x chunk (bf16)
            pl.BlockSpec((Bp, 1), const2),               # last valid time index
            pl.BlockSpec((None, Dp, 4 * Hp), dir_map3),  # Wih (per direction)
            pl.BlockSpec((None, Hp, 4 * Hp), dir_map3),  # Whh (per direction)
            pl.BlockSpec((None, 1, 4 * Hp), dir_map3),   # bias (per direction)
        ],
        out_specs=[
            pl.BlockSpec((None, Bp, Hp), dir_map3),      # pooled max (resident over time)
            pl.BlockSpec((None, Bp, Hp), dir_map3),      # h at t=0 (fwd) / t=len-1 (bwd)
        ],
        scratch_shapes=[
            pltpu.VMEM((Tc * Bp, 4 * Hp), jnp.float32),  # hoisted x@Wih for the chunk
            pltpu.VMEM((Bp, Hp), jnp.float32),           # h state
            pltpu.VMEM((Bp, Hp), jnp.float32),           # c state
        ],
    )
    out_shapes = (jax.ShapeDtypeStruct((2, Bp, Hp), jnp.float32),
                  jax.ShapeDtypeStruct((2, Bp, Hp), jnp.float32))

    kernel = functools.partial(_bilstm_kernel, true_len=T, pad_len=Tp,
                               chunk=Tc, unroll=unroll)
    pooled, special = pl.pallas_call(
        kernel,
        grid_spec=grid_spec,
        out_shape=out_shapes,
        compiler_params=pltpu.CompilerParams(
            # direction axis is independent (fills v7x's 2nd TensorCore);
            # the time-chunk axis is a recurrence.
            dimension_semantics=("parallel", "arbitrary"),
            vmem_limit_bytes=_vmem_budget_bytes(Tc, Bp, Dp, Hp),
        ),
    )(x_flat, lidx, wih, whh, bias)

    return (pooled[0, :B, :H], pooled[1, :B, :H],
            special[0, :B, :H], special[1, :B, :H])


def bi_rnn_encoder(embed, lengths, params, mtype="pool"):
    """Mirrors BiRNNEncoder.forward.  embed: (B, T, D) f32, lengths: (B,) int."""
    assert lengths is not None, "Lengths of input is needed when using RNN"
    lidx = lengths - 1                                   # `lengths -= 1`
    pool_f, pool_b, h0_f, hlast_b = bilstm_readouts(embed, lidx, params)
    if mtype == "pool":
        return jnp.concatenate([pool_f, pool_b], axis=1)
    elif mtype == "avg":
        raise NotImplementedError
    elif mtype == "concat":
        return jnp.concatenate([h0_f, hlast_b], axis=1)
    else:
        raise NotImplementedError


def init_params(key, D, H):
    """Deterministic init matching torch.nn.LSTM default U(-1/sqrt(H), 1/sqrt(H))."""
    k = 1.0 / (H ** 0.5)
    keys = jax.random.split(key, 8)

    def u(kk, shape):
        return jax.random.uniform(kk, shape, jnp.float32, -k, k)

    return dict(
        wih_f=u(keys[0], (D, 4 * H)),
        whh_f=u(keys[1], (H, 4 * H)),
        b_f=u(keys[2], (1, 4 * H)) + u(keys[3], (1, 4 * H)),   # b_ih + b_hh (fwd)
        wih_b=u(keys[4], (D, 4 * H)),
        whh_b=u(keys[5], (H, 4 * H)),
        b_b=u(keys[6], (1, 4 * H)) + u(keys[7], (1, 4 * H)),   # b_ih + b_hh (bwd)
    )


def _reference_readouts(embed, lidx, params):
    """Pure-JAX reference (lax.scan) with matching numerics (bf16 MXU inputs,
    f32 accumulation / state) for correctness checking."""
    B, T, D = embed.shape
    H = params["whh_f"].shape[0]
    bf = jnp.bfloat16

    def make_cell(wih, whh, b):
        wih = wih.astype(bf)
        whh = whh.astype(bf)

        def cell(carry, x):
            h, c = carry
            gates = (jnp.dot(x.astype(bf), wih, preferred_element_type=jnp.float32)
                     + jnp.dot(h.astype(bf), whh, preferred_element_type=jnp.float32)
                     + b)
            i = jax.nn.sigmoid(gates[:, :H])
            f = jax.nn.sigmoid(gates[:, H:2 * H])
            g = jnp.tanh(gates[:, 2 * H:3 * H])
            o = jax.nn.sigmoid(gates[:, 3 * H:])
            c = f * c + i * g
            h = o * jnp.tanh(c)
            return (h, c), h

        return cell

    x_tbd = jnp.transpose(embed, (1, 0, 2)).astype(jnp.float32)
    init = (jnp.zeros((B, H), jnp.float32), jnp.zeros((B, H), jnp.float32))
    _, out_f = jax.lax.scan(
        make_cell(params["wih_f"], params["whh_f"], params["b_f"]), init, x_tbd)
    _, out_b_rev = jax.lax.scan(
        make_cell(params["wih_b"], params["whh_b"], params["b_b"]), init, x_tbd[::-1])
    out_b = out_b_rev[::-1]

    pool_f = out_f.max(axis=0)
    pool_b = out_b.max(axis=0)
    h0_f = out_f[0]
    hlast_b = out_b[lidx, jnp.arange(B)]
    return pool_f, pool_b, h0_f, hlast_b


if __name__ == "__main__":
    B, T, D, H = 2, 8, 16, 32
    key = jax.random.PRNGKey(0)
    k_emb, k_par = jax.random.split(key)
    embed = jax.random.normal(k_emb, (B, T, D), jnp.float32)
    lengths = jnp.array([T, T - 2], dtype=jnp.int32)
    params = init_params(k_par, D, H)

    enc_pool = bi_rnn_encoder(embed, lengths, params, mtype="pool")
    enc_concat = bi_rnn_encoder(embed, lengths, params, mtype="concat")
    jax.block_until_ready((enc_pool, enc_concat))

    assert enc_pool.shape == (B, 2 * H)
    assert enc_concat.shape == (B, 2 * H)

    lidx = lengths - 1
    rpf, rpb, rh0, rht = _reference_readouts(embed, lidx, params)
    ref_pool = jnp.concatenate([rpf, rpb], axis=1)
    ref_concat = jnp.concatenate([rh0, rht], axis=1)
    assert jnp.allclose(enc_pool, ref_pool, atol=2e-2, rtol=2e-2)
    assert jnp.allclose(enc_concat, ref_concat, atol=2e-2, rtol=2e-2)

    print("KERNEL_OK")
</pallas_src>

<mosaic_0001>
module attributes {stable_mosaic.version = 11 : i64} {
  func.func @_bilstm_kernel(%arg0: i32, %arg1: i32, %arg2: memref<64x128xbf16, #tpu.memory_space<vmem>>, %arg3: memref<8x1xi32, #tpu.memory_space<vmem>>, %arg4: memref<1x128x512xbf16, #tpu.memory_space<vmem>>, %arg5: memref<1x128x512xbf16, #tpu.memory_space<vmem>>, %arg6: memref<1x1x512xf32, #tpu.memory_space<vmem>>, %arg7: memref<1x8x128xf32, #tpu.memory_space<vmem>>, %arg8: memref<1x8x128xf32, #tpu.memory_space<vmem>>, %arg9: memref<64x512xf32, #tpu.memory_space<vmem>>, %arg10: memref<8x128xf32, #tpu.memory_space<vmem>>, %arg11: memref<8x128xf32, #tpu.memory_space<vmem>>) attributes {dimension_semantics = [#tpu.dimension_semantics<parallel>, #tpu.dimension_semantics<arbitrary>], iteration_bounds = array<i64: 2, 1>, scalar_prefetch = 0 : i64, scratch_operands = 3 : i64, tpu.core_type = #tpu.core_type<tc>, window_params = [{transform_indices = @transform_0, window_bounds = array<i64: 64, 128>}, {pipeline_mode = #tpu.pipeline_mode<synchronous>, transform_indices = @transform_1, window_bounds = array<i64: 8, 1>}, {transform_indices = @transform_2, window_bounds = array<i64: 1, 128, 512>}, {transform_indices = @transform_3, window_bounds = array<i64: 1, 128, 512>}, {transform_indices = @transform_4, window_bounds = array<i64: 1, 1, 512>}, {transform_indices = @transform_5, window_bounds = array<i64: 1, 8, 128>}, {transform_indices = @transform_6, window_bounds = array<i64: 1, 8, 128>}]} {
    %c1_i32 = arith.constant 1 : i32
    %0 = arith.cmpi eq, %arg0, %c1_i32 : i32
    %c0_i32 = arith.constant 0 : i32
    %1 = arith.cmpi eq, %arg1, %c0_i32 : i32
    %2 = arith.extui %1 : i1 to i32
    %c0_i32_0 = arith.constant 0 : i32
    %3 = arith.cmpi ne, %2, %c0_i32_0 : i32
    scf.if %3 {
      %cst_132 = arith.constant 0.000000e+00 : f32
      %437 = vector.broadcast %cst_132 : f32 to vector<8x128xf32>
      %c0_133 = arith.constant 0 : index
      %c0_134 = arith.constant 0 : index
      %438 = vector.load %arg10[%c0_133, %c0_134] : memref<8x128xf32, #tpu.memory_space<vmem>>, vector<8x128xf32>
      tpu.vector_store %arg10[%c0_133, %c0_134], %437 {strides = array<i32>} : memref<8x128xf32, #tpu.memory_space<vmem>>, vector<8x128xf32>,
      %c0_135 = arith.constant 0 : index
      %c0_136 = arith.constant 0 : index
      %439 = vector.load %arg11[%c0_135, %c0_136] : memref<8x128xf32, #tpu.memory_space<vmem>>, vector<8x128xf32>
      tpu.vector_store %arg11[%c0_135, %c0_136], %437 {strides = array<i32>} : memref<8x128xf32, #tpu.memory_space<vmem>>, vector<8x128xf32>,
      %c0_137 = arith.constant 0 : index
      %c0_138 = arith.constant 0 : index
      %c0_139 = arith.constant 0 : index
      %440 = vector.load %arg8[%c0_137, %c0_138, %c0_139] : memref<1x8x128xf32, #tpu.memory_space<vmem>>, vector<1x8x128xf32>
      %441 = vector.shape_cast %440 : vector<1x8x128xf32> to vector<8x128xf32>
      %442 = vector.shape_cast %437 : vector<8x128xf32> to vector<1x8x128xf32>
      tpu.vector_store %arg8[%c0_137, %c0_138, %c0_139], %442 {strides = array<i32>} : memref<1x8x128xf32, #tpu.memory_space<vmem>>, vector<1x8x128xf32>,
      %cst_140 = arith.constant 0xFF800000 : f32
      %443 = vector.broadcast %cst_140 : f32 to vector<8x128xf32>
      %c0_141 = arith.constant 0 : index
      %c0_142 = arith.constant 0 : index
      %c0_143 = arith.constant 0 : index
      %444 = vector.load %arg7[%c0_141, %c0_142, %c0_143] : memref<1x8x128xf32, #tpu.memory_space<vmem>>, vector<1x8x128xf32>
      %445 = vector.shape_cast %444 : vector<1x8x128xf32> to vector<8x128xf32>
      %446 = vector.shape_cast %443 : vector<8x128xf32> to vector<1x8x128xf32>
      tpu.vector_store %arg7[%c0_141, %c0_142, %c0_143], %446 {strides = array<i32>} : memref<1x8x128xf32, #tpu.memory_space<vmem>>, vector<1x8x128xf32>,
    } else {
    }
    %c0 = arith.constant 0 : index
    %c0_1 = arith.constant 0 : index
    %4 = vector.load %arg2[%c0, %c0_1] : memref<64x128xbf16, #tpu.memory_space<vmem>>, vector<64x128xbf16>
    %c0_2 = arith.constant 0 : index
    %c0_3 = arith.constant 0 : index
    %c0_4 = arith.constant 0 : index
    %5 = vector.load %arg4[%c0_2, %c0_3, %c0_4] : memref<1x128x512xbf16, #tpu.memory_space<vmem>>, vector<1x128x512xbf16>
    %6 = vector.shape_cast %5 : vector<1x128x512xbf16> to vector<128x512xbf16>
    %cst = arith.constant dense<0.000000e+00> : vector<64x512xf32>
    %7 = tpu.matmul %4, %6, %cst {dimension_numbers = #tpu.dot_dimension_numbers<[1], [0], [0], [1], [0, 0, 1, 1], [], []>} : vector<64x128xbf16>, vector<128x512xbf16>, vector<64x512xf32> -> vector<64x512xf32>
    %c0_5 = arith.constant 0 : index
    %c0_6 = arith.constant 0 : index
    %8 = vector.load %arg9[%c0_5, %c0_6] : memref<64x512xf32, #tpu.memory_space<vmem>>, vector<64x512xf32>
    tpu.vector_store %arg9[%c0_5, %c0_6], %7 {strides = array<i32>} : memref<64x512xf32, #tpu.memory_space<vmem>>, vector<64x512xf32>,
    %c0_7 = arith.constant 0 : index
    %c0_8 = arith.constant 0 : index
    %c0_9 = arith.constant 0 : index
    %9 = vector.load %arg6[%c0_7, %c0_8, %c0_9] : memref<1x1x512xf32, #tpu.memory_space<vmem>>, vector<1x1x512xf32>
    %10 = vector.shape_cast %9 : vector<1x1x512xf32> to vector<1x512xf32>
    %c0_10 = arith.constant 0 : index
    %c0_11 = arith.constant 0 : index
    %11 = vector.load %arg3[%c0_10, %c0_11] : memref<8x1xi32, #tpu.memory_space<vmem>>, vector<8x1xi32>
    %c0_i32_12 = arith.constant 0 : i32
    %12 = vector.broadcast %c0_i32_12 : i32 to vector<8x1xi32>
    %13 = arith.select %0, %11, %12 : vector<8x1xi32>
    %c8_i32 = arith.constant 8 : i32
    %14 = arith.muli %arg1, %c8_i32 : i32
    %c0_13 = arith.constant 0 : index
    %c0_14 = arith.constant 0 : index
    %15 = vector.load %arg10[%c0_13, %c0_14] : memref<8x128xf32, #tpu.memory_space<vmem>>, vector<8x128xf32>
    %c0_15 = arith.constant 0 : index
    %c0_16 = arith.constant 0 : index
    %16 = vector.load %arg11[%c0_15, %c0_16] : memref<8x128xf32, #tpu.memory_space<vmem>>, vector<8x128xf32>
    %c0_17 = arith.constant 0 : index
    %c0_18 = arith.constant 0 : index
    %c0_19 = arith.constant 0 : index
    %17 = vector.load %arg7[%c0_17, %c0_18, %c0_19] : memref<1x8x128xf32, #tpu.memory_space<vmem>>, vector<1x8x128xf32>
    %18 = vector.shape_cast %17 : vector<1x8x128xf32> to vector<8x128xf32>
    %c0_20 = arith.constant 0 : index
    %c0_21 = arith.constant 0 : index
    %c0_22 = arith.constant 0 : index
    %19 = vector.load %arg8[%c0_20, %c0_21, %c0_22] : memref<1x8x128xf32, #tpu.memory_space<vmem>>, vector<1x8x128xf32>
    %20 = vector.shape_cast %19 : vector<1x8x128xf32> to vector<8x128xf32>
    %c0_i32_23 = arith.constant 0 : i32
    %21 = arith.addi %14, %c0_i32_23 : i32
    %c7_i32 = arith.constant 7 : i32
    %22 = arith.subi %c7_i32, %21 : i32
    %23 = arith.select %0, %22, %21 : i32
    %c7_i32_24 = arith.constant 7 : i32
    %24 = arith.subi %c7_i32_24, %c0_i32_23 : i32
    %25 = arith.select %0, %24, %c0_i32_23 : i32
    %c8_i32_25 = arith.constant 8 : i32
    %26 = arith.muli %25, %c8_i32_25 : i32
    %27 = tpu.assume_multiple %26, 8 : i32
    %28 = arith.index_cast %27 : i32 to index
    %c0_26 = arith.constant 0 : index
    %29 = vector.load %arg9[%28, %c0_26] : memref<64x512xf32, #tpu.memory_space<vmem>>, vector<8x512xf32>
    %30 = arith.truncf %15 : vector<8x128xf32> to vector<8x128xbf16>
    %c0_27 = arith.constant 0 : index
    %c0_28 = arith.constant 0 : index
    %c0_29 = arith.constant 0 : index
    %31 = vector.load %arg5[%c0_27, %c0_28, %c0_29] : memref<1x128x512xbf16, #tpu.memory_space<vmem>>, vector<1x128x512xbf16>
    %32 = vector.shape_cast %31 : vector<1x128x512xbf16> to vector<128x512xbf16>
    %cst_30 = arith.constant dense<0.000000e+00> : vector<8x512xf32>
    %33 = tpu.matmul %30, %32, %cst_30 {dimension_numbers = #tpu.dot_dimension_numbers<[1], [0], [0], [1], [0, 0, 1, 1], [], []>} : vector<8x128xbf16>, vector<128x512xbf16>, vector<8x512xf32> -> vector<8x512xf32>
    %34 = arith.addf %29, %33 : vector<8x512xf32>
    %35 = vector.broadcast %10 : vector<1x512xf32> to vector<8x512xf32>
    %36 = arith.addf %34, %35 : vector<8x512xf32>
    %37 = vector.extract_strided_slice %36 {offsets = [0, 0], sizes = [8, 128], strides = [1, 1]} : vector<8x512xf32> to vector<8x128xf32>
    %38 = arith.negf %37 : vector<8x128xf32>
    %39 = math.exp %38 : vector<8x128xf32>
    %cst_31 = arith.constant 1.000000e+00 : f32
    %40 = vector.broadcast %cst_31 : f32 to vector<8x128xf32>
    %41 = arith.addf %40, %39 : vector<8x128xf32>
    %42 = arith.divf %40, %41 : vector<8x128xf32>
    %43 = vector.extract_strided_slice %36 {offsets = [0, 128], sizes = [8, 128], strides = [1, 1]} : vector<8x512xf32> to vector<8x128xf32>
    %44 = arith.negf %43 : vector<8x128xf32>
    %45 = math.exp %44 : vector<8x128xf32>
    %cst_32 = arith.constant 1.000000e+00 : f32
    %46 = vector.broadcast %cst_32 : f32 to vector<8x128xf32>
    %47 = arith.addf %46, %45 : vector<8x128xf32>
    %48 = arith.divf %46, %47 : vector<8x128xf32>
    %49 = vector.extract_strided_slice %36 {offsets = [0, 256], sizes = [8, 128], strides = [1, 1]} : vector<8x512xf32> to vector<8x128xf32>
    %50 = math.tanh %49 : vector<8x128xf32>
    %51 = vector.extract_strided_slice %36 {offsets = [0, 384], sizes = [8, 128], strides = [1, 1]} : vector<8x512xf32> to vector<8x128xf32>
    %52 = arith.negf %51 : vector<8x128xf32>
    %53 = math.exp %52 : vector<8x128xf32>
    %cst_33 = arith.constant 1.000000e+00 : f32
    %54 = vector.broadcast %cst_33 : f32 to vector<8x128xf32>
    %55 = arith.addf %54, %53 : vector<8x128xf32>
    %56 = arith.divf %54, %55 : vector<8x128xf32>
    %57 = arith.mulf %48, %16 : vector<8x128xf32>
    %58 = arith.mulf %42, %50 : vector<8x128xf32>
    %59 = arith.addf %57, %58 : vector<8x128xf32>
    %60 = math.tanh %59 : vector<8x128xf32>
    %61 = arith.mulf %56, %60 : vector<8x128xf32>
    %c8_i32_34 = arith.constant 8 : i32
    %62 = arith.cmpi slt, %23, %c8_i32_34 : i32
    %63 = arith.select %62, %61, %15 : vector<8x128xf32>
    %64 = arith.select %62, %59, %16 : vector<8x128xf32>
    %65 = arith.maximumf %18, %61 : vector<8x128xf32>
    %66 = arith.select %62, %65, %18 : vector<8x128xf32>
    %67 = vector.broadcast %23 : i32 to vector<8x1xi32>
    %68 = arith.cmpi eq, %13, %67 : vector<8x1xi32>
    %69 = vector.shape_cast %68 : vector<8x1xi1> to vector<8x1xi1>
    %70 = vector.broadcast %69 : vector<8x1xi1> to vector<8x128xi1>
    %71 = arith.select %70, %61, %20 : vector<8x128xi1>, vector<8x128xf32>
    %c1_i32_35 = arith.constant 1 : i32
    %72 = arith.addi %14, %c1_i32_35 : i32
    %c7_i32_36 = arith.constant 7 : i32
    %73 = arith.subi %c7_i32_36, %72 : i32
    %74 = arith.select %0, %73, %72 : i32
    %c7_i32_37 = arith.constant 7 : i32
    %75 = arith.subi %c7_i32_37, %c1_i32_35 : i32
    %76 = arith.select %0, %75, %c1_i32_35 : i32
    %c8_i32_38 = arith.constant 8 : i32
    %77 = arith.muli %76, %c8_i32_38 : i32
    %78 = tpu.assume_multiple %77, 8 : i32
    %79 = arith.index_cast %78 : i32 to index
    %c0_39 = arith.constant 0 : index
    %80 = vector.load %arg9[%79, %c0_39] : memref<64x512xf32, #tpu.memory_space<vmem>>, vector<8x512xf32>
    %81 = arith.truncf %63 : vector<8x128xf32> to vector<8x128xbf16>
    %c0_40 = arith.constant 0 : index
    %c0_41 = arith.constant 0 : index
    %c0_42 = arith.constant 0 : index
    %82 = vector.load %arg5[%c0_40, %c0_41, %c0_42] : memref<1x128x512xbf16, #tpu.memory_space<vmem>>, vector<1x128x512xbf16>
    %83 = vector.shape_cast %82 : vector<1x128x512xbf16> to vector<128x512xbf16>
    %cst_43 = arith.constant dense<0.000000e+00> : vector<8x512xf32>
    %84 = tpu.matmul %81, %83, %cst_43 {dimension_numbers = #tpu.dot_dimension_numbers<[1], [0], [0], [1], [0, 0, 1, 1], [], []>} : vector<8x128xbf16>, vector<128x512xbf16>, vector<8x512xf32> -> vector<8x512xf32>
    %85 = arith.addf %80, %84 : vector<8x512xf32>
    %86 = vector.broadcast %10 : vector<1x512xf32> to vector<8x512xf32>
    %87 = arith.addf %85, %86 : vector<8x512xf32>
    %88 = vector.extract_strided_slice %87 {offsets = [0, 0], sizes = [8, 128], strides = [1, 1]} : vector<8x512xf32> to vector<8x128xf32>
    %89 = arith.negf %88 : vector<8x128xf32>
    %90 = math.exp %89 : vector<8x128xf32>
    %cst_44 = arith.constant 1.000000e+00 : f32
    %91 = vector.broadcast %cst_44 : f32 to vector<8x128xf32>
    %92 = arith.addf %91, %90 : vector<8x128xf32>
    %93 = arith.divf %91, %92 : vector<8x128xf32>
    %94 = vector.extract_strided_slice %87 {offsets = [0, 128], sizes = [8, 128], strides = [1, 1]} : vector<8x512xf32> to vector<8x128xf32>
    %95 = arith.negf %94 : vector<8x128xf32>
    %96 = math.exp %95 : vector<8x128xf32>
    %cst_45 = arith.constant 1.000000e+00 : f32
    %97 = vector.broadcast %cst_45 : f32 to vector<8x128xf32>
    %98 = arith.addf %97, %96 : vector<8x128xf32>
    %99 = arith.divf %97, %98 : vector<8x128xf32>
    %100 = vector.extract_strided_slice %87 {offsets = [0, 256], sizes = [8, 128], strides = [1, 1]} : vector<8x512xf32> to vector<8x128xf32>
    %101 = math.tanh %100 : vector<8x128xf32>
    %102 = vector.extract_strided_slice %87 {offsets = [0, 384], sizes = [8, 128], strides = [1, 1]} : vector<8x512xf32> to vector<8x128xf32>
    %103 = arith.negf %102 : vector<8x128xf32>
    %104 = math.exp %103 : vector<8x128xf32>
    %cst_46 = arith.constant 1.000000e+00 : f32
    %105 = vector.broadcast %cst_46 : f32 to vector<8x128xf32>
    %106 = arith.addf %105, %104 : vector<8x128xf32>
    %107 = arith.divf %105, %106 : vector<8x128xf32>
    %108 = arith.mulf %99, %64 : vector<8x128xf32>
    %109 = arith.mulf %93, %101 : vector<8x128xf32>
    %110 = arith.addf %108, %109 : vector<8x128xf32>
    %111 = math.tanh %110 : vector<8x128xf32>
    %112 = arith.mulf %107, %111 : vector<8x128xf32>
    %c8_i32_47 = arith.constant 8 : i32
    %113 = arith.cmpi slt, %74, %c8_i32_47 : i32
    %114 = arith.select %113, %112, %63 : vector<8x128xf32>
    %115 = arith.select %113, %110, %64 : vector<8x128xf32>
    %116 = arith.maximumf %66, %112 : vector<8x128xf32>
    %117 = arith.select %113, %116, %66 : vector<8x128xf32>
    %118 = vector.broadcast %74 : i32 to vector<8x1xi32>
    %119 = arith.cmpi eq, %13, %118 : vector<8x1xi32>
    %120 = vector.shape_cast %119 : vector<8x1xi1> to vector<8x1xi1>
    %121 = vector.broadcast %120 : vector<8x1xi1> to vector<8x128xi1>
    %122 = arith.select %121, %112, %71 : vector<8x128xi1>, vector<8x128xf32>
    %c2_i32 = arith.constant 2 : i32
    %123 = arith.addi %14, %c2_i32 : i32
    %c7_i32_48 = arith.constant 7 : i32
    %124 = arith.subi %c7_i32_48, %123 : i32
    %125 = arith.select %0, %124, %123 : i32
    %c7_i32_49 = arith.constant 7 : i32
    %126 = arith.subi %c7_i32_49, %c2_i32 : i32
    %127 = arith.select %0, %126, %c2_i32 : i32
    %c8_i32_50 = arith.constant 8 : i32
    %128 = arith.muli %127, %c8_i32_50 : i32
    %129 = tpu.assume_multiple %128, 8 : i32
    %130 = arith.index_cast %129 : i32 to index
    %c0_51 = arith.constant 0 : index
    %131 = vector.load %arg9[%130, %c0_51] : memref<64x512xf32, #tpu.memory_space<vmem>>, vector<8x512xf32>
    %132 = arith.truncf %114 : vector<8x128xf32> to vector<8x128xbf16>
    %c0_52 = arith.constant 0 : index
    %c0_53 = arith.constant 0 : index
    %c0_54 = arith.constant 0 : index
    %133 = vector.load %arg5[%c0_52, %c0_53, %c0_54] : memref<1x128x512xbf16, #tpu.memory_space<vmem>>, vector<1x128x512xbf16>
    %134 = vector.shape_cast %133 : vector<1x128x512xbf16> to vector<128x512xbf16>
    %cst_55 = arith.constant dense<0.000000e+00> : vector<8x512xf32>
    %135 = tpu.matmul %132, %134, %cst_55 {dimension_numbers = #tpu.dot_dimension_numbers<[1], [0], [0], [1], [0, 0, 1, 1], [], []>} : vector<8x128xbf16>, vector<128x512xbf16>, vector<8x512xf32> -> vector<8x512xf32>
    %136 = arith.addf %131, %135 : vector<8x512xf32>
    %137 = vector.broadcast %10 : vector<1x512xf32> to vector<8x512xf32>
    %138 = arith.addf %136, %137 : vector<8x512xf32>
    %139 = vector.extract_strided_slice %138 {offsets = [0, 0], sizes = [8, 128], strides = [1, 1]} : vector<8x512xf32> to vector<8x128xf32>
    %140 = arith.negf %139 : vector<8x128xf32>
    %141 = math.exp %140 : vector<8x128xf32>
    %cst_56 = arith.constant 1.000000e+00 : f32
    %142 = vector.broadcast %cst_56 : f32 to vector<8x128xf32>
    %143 = arith.addf %142, %141 : vector<8x128xf32>
    %144 = arith.divf %142, %143 : vector<8x128xf32>
    %145 = vector.extract_strided_slice %138 {offsets = [0, 128], sizes = [8, 128], strides = [1, 1]} : vector<8x512xf32> to vector<8x128xf32>
    %146 = arith.negf %145 : vector<8x128xf32>
    %147 = math.exp %146 : vector<8x128xf32>
    %cst_57 = arith.constant 1.000000e+00 : f32
    %148 = vector.broadcast %cst_57 : f32 to vector<8x128xf32>
    %149 = arith.addf %148, %147 : vector<8x128xf32>
    %150 = arith.divf %148, %149 : vector<8x128xf32>
    %151 = vector.extract_strided_slice %138 {offsets = [0, 256], sizes = [8, 128], strides = [1, 1]} : vector<8x512xf32> to vector<8x128xf32>
    %152 = math.tanh %151 : vector<8x128xf32>
    %153 = vector.extract_strided_slice %138 {offsets = [0, 384], sizes = [8, 128], strides = [1, 1]} : vector<8x512xf32> to vector<8x128xf32>
    %154 = arith.negf %153 : vector<8x128xf32>
    %155 = math.exp %154 : vector<8x128xf32>
    %cst_58 = arith.constant 1.000000e+00 : f32
    %156 = vector.broadcast %cst_58 : f32 to vector<8x128xf32>
    %157 = arith.addf %156, %155 : vector<8x128xf32>
    %158 = arith.divf %156, %157 : vector<8x128xf32>
    %159 = arith.mulf %150, %115 : vector<8x128xf32>
    %160 = arith.mulf %144, %152 : vector<8x128xf32>
    %161 = arith.addf %159, %160 : vector<8x128xf32>
    %162 = math.tanh %161 : vector<8x128xf32>
    %163 = arith.mulf %158, %162 : vector<8x128xf32>
    %c8_i32_59 = arith.constant 8 : i32
    %164 = arith.cmpi slt, %125, %c8_i32_59 : i32
    %165 = arith.select %164, %163, %114 : vector<8x128xf32>
    %166 = arith.select %164, %161, %115 : vector<8x128xf32>
    %167 = arith.maximumf %117, %163 : vector<8x128xf32>
    %168 = arith.select %164, %167, %117 : vector<8x128xf32>
    %169 = vector.broadcast %125 : i32 to vector<8x1xi32>
    %170 = arith.cmpi eq, %13, %169 : vector<8x1xi32>
    %171 = vector.shape_cast %170 : vector<8x1xi1> to vector<8x1xi1>
    %172 = vector.broadcast %171 : vector<8x1xi1> to vector<8x128xi1>
    %173 = arith.select %172, %163, %122 : vector<8x128xi1>, vector<8x128xf32>
    %c3_i32 = arith.constant 3 : i32
    %174 = arith.addi %14, %c3_i32 : i32
    %c7_i32_60 = arith.constant 7 : i32
    %175 = arith.subi %c7_i32_60, %174 : i32
    %176 = arith.select %0, %175, %174 : i32
    %c7_i32_61 = arith.constant 7 : i32
    %177 = arith.subi %c7_i32_61, %c3_i32 : i32
    %178 = arith.select %0, %177, %c3_i32 : i32
    %c8_i32_62 = arith.constant 8 : i32
    %179 = arith.muli %178, %c8_i32_62 : i32
    %180 = tpu.assume_multiple %179, 8 : i32
    %181 = arith.index_cast %180 : i32 to index
    %c0_63 = arith.constant 0 : index
    %182 = vector.load %arg9[%181, %c0_63] : memref<64x512xf32, #tpu.memory_space<vmem>>, vector<8x512xf32>
    %183 = arith.truncf %165 : vector<8x128xf32> to vector<8x128xbf16>
    %c0_64 = arith.constant 0 : index
    %c0_65 = arith.constant 0 : index
    %c0_66 = arith.constant 0 : index
    %184 = vector.load %arg5[%c0_64, %c0_65, %c0_66] : memref<1x128x512xbf16, #tpu.memory_space<vmem>>, vector<1x128x512xbf16>
    %185 = vector.shape_cast %184 : vector<1x128x512xbf16> to vector<128x512xbf16>
    %cst_67 = arith.constant dense<0.000000e+00> : vector<8x512xf32>
    %186 = tpu.matmul %183, %185, %cst_67 {dimension_numbers = #tpu.dot_dimension_numbers<[1], [0], [0], [1], [0, 0, 1, 1], [], []>} : vector<8x128xbf16>, vector<128x512xbf16>, vector<8x512xf32> -> vector<8x512xf32>
    %187 = arith.addf %182, %186 : vector<8x512xf32>
    %188 = vector.broadcast %10 : vector<1x512xf32> to vector<8x512xf32>
    %189 = arith.addf %187, %188 : vector<8x512xf32>
    %190 = vector.extract_strided_slice %189 {offsets = [0, 0], sizes = [8, 128], strides = [1, 1]} : vector<8x512xf32> to vector<8x128xf32>
    %191 = arith.negf %190 : vector<8x128xf32>
    %192 = math.exp %191 : vector<8x128xf32>
    %cst_68 = arith.constant 1.000000e+00 : f32
    %193 = vector.broadcast %cst_68 : f32 to vector<8x128xf32>
    %194 = arith.addf %193, %192 : vector<8x128xf32>
    %195 = arith.divf %193, %194 : vector<8x128xf32>
    %196 = vector.extract_strided_slice %189 {offsets = [0, 128], sizes = [8, 128], strides = [1, 1]} : vector<8x512xf32> to vector<8x128xf32>
    %197 = arith.negf %196 : vector<8x128xf32>
    %198 = math.exp %197 : vector<8x128xf32>
    %cst_69 = arith.constant 1.000000e+00 : f32
    %199 = vector.broadcast %cst_69 : f32 to vector<8x128xf32>
    %200 = arith.addf %199, %198 : vector<8x128xf32>
    %201 = arith.divf %199, %200 : vector<8x128xf32>
    %202 = vector.extract_strided_slice %189 {offsets = [0, 256], sizes = [8, 128], strides = [1, 1]} : vector<8x512xf32> to vector<8x128xf32>
    %203 = math.tanh %202 : vector<8x128xf32>
    %204 = vector.extract_strided_slice %189 {offsets = [0, 384], sizes = [8, 128], strides = [1, 1]} : vector<8x512xf32> to vector<8x128xf32>
    %205 = arith.negf %204 : vector<8x128xf32>
    %206 = math.exp %205 : vector<8x128xf32>
    %cst_70 = arith.constant 1.000000e+00 : f32
    %207 = vector.broadcast %cst_70 : f32 to vector<8x128xf32>
    %208 = arith.addf %207, %206 : vector<8x128xf32>
    %209 = arith.divf %207, %208 : vector<8x128xf32>
    %210 = arith.mulf %201, %166 : vector<8x128xf32>
    %211 = arith.mulf %195, %203 : vector<8x128xf32>
    %212 = arith.addf %210, %211 : vector<8x128xf32>
    %213 = math.tanh %212 : vector<8x128xf32>
    %214 = arith.mulf %209, %213 : vector<8x128xf32>
    %c8_i32_71 = arith.constant 8 : i32
    %215 = arith.cmpi slt, %176, %c8_i32_71 : i32
    %216 = arith.select %215, %214, %165 : vector<8x128xf32>
    %217 = arith.select %215, %212, %166 : vector<8x128xf32>
    %218 = arith.maximumf %168, %214 : vector<8x128xf32>
    %219 = arith.select %215, %218, %168 : vector<8x128xf32>
    %220 = vector.broadcast %176 : i32 to vector<8x1xi32>
    %221 = arith.cmpi eq, %13, %220 : vector<8x1xi32>
    %222 = vector.shape_cast %221 : vector<8x1xi1> to vector<8x1xi1>
    %223 = vector.broadcast %222 : vector<8x1xi1> to vector<8x128xi1>
    %224 = arith.select %223, %214, %173 : vector<8x128xi1>, vector<8x128xf32>
    %c4_i32 = arith.constant 4 : i32
    %225 = arith.addi %14, %c4_i32 : i32
    %c7_i32_72 = arith.constant 7 : i32
    %226 = arith.subi %c7_i32_72, %225 : i32
    %227 = arith.select %0, %226, %225 : i32
    %c7_i32_73 = arith.constant 7 : i32
    %228 = arith.subi %c7_i32_73, %c4_i32 : i32
    %229 = arith.select %0, %228, %c4_i32 : i32
    %c8_i32_74 = arith.constant 8 : i32
    %230 = arith.muli %229, %c8_i32_74 : i32
    %231 = tpu.assume_multiple %230, 8 : i32
    %232 = arith.index_cast %231 : i32 to index
    %c0_75 = arith.constant 0 : index
    %233 = vector.load %arg9[%232, %c0_75] : memref<64x512xf32, #tpu.memory_space<vmem>>, vector<8x512xf32>
    %234 = arith.truncf %216 : vector<8x128xf32> to vector<8x128xbf16>
    %c0_76 = arith.constant 0 : index
    %c0_77 = arith.constant 0 : index
    %c0_78 = arith.constant 0 : index
    %235 = vector.load %arg5[%c0_76, %c0_77, %c0_78] : memref<1x128x512xbf16, #tpu.memory_space<vmem>>, vector<1x128x512xbf16>
    %236 = vector.shape_cast %235 : vector<1x128x512xbf16> to vector<128x512xbf16>
    %cst_79 = arith.constant dense<0.000000e+00> : vector<8x512xf32>
    %237 = tpu.matmul %234, %236, %cst_79 {dimension_numbers = #tpu.dot_dimension_numbers<[1], [0], [0], [1], [0, 0, 1, 1], [], []>} : vector<8x128xbf16>, vector<128x512xbf16>, vector<8x512xf32> -> vector<8x512xf32>
    %238 = arith.addf %233, %237 : vector<8x512xf32>
    %239 = vector.broadcast %10 : vector<1x512xf32> to vector<8x512xf32>
    %240 = arith.addf %238, %239 : vector<8x512xf32>
    %241 = vector.extract_strided_slice %240 {offsets = [0, 0], sizes = [8, 128], strides = [1, 1]} : vector<8x512xf32> to vector<8x128xf32>
    %242 = arith.negf %241 : vector<8x128xf32>
    %243 = math.exp %242 : vector<8x128xf32>
    %cst_80 = arith.constant 1.000000e+00 : f32
    %244 = vector.broadcast %cst_80 : f32 to vector<8x128xf32>
    %245 = arith.addf %244, %243 : vector<8x128xf32>
    %246 = arith.divf %244, %245 : vector<8x128xf32>
    %247 = vector.extract_strided_slice %240 {offsets = [0, 128], sizes = [8, 128], strides = [1, 1]} : vector<8x512xf32> to vector<8x128xf32>
    %248 = arith.negf %247 : vector<8x128xf32>
    %249 = math.exp %248 : vector<8x128xf32>
    %cst_81 = arith.constant 1.000000e+00 : f32
    %250 = vector.broadcast %cst_81 : f32 to vector<8x128xf32>
    %251 = arith.addf %250, %249 : vector<8x128xf32>
    %252 = arith.divf %250, %251 : vector<8x128xf32>
    %253 = vector.extract_strided_slice %240 {offsets = [0, 256], sizes = [8, 128], strides = [1, 1]} : vector<8x512xf32> to vector<8x128xf32>
    %254 = math.tanh %253 : vector<8x128xf32>
    %255 = vector.extract_strided_slice %240 {offsets = [0, 384], sizes = [8, 128], strides = [1, 1]} : vector<8x512xf32> to vector<8x128xf32>
    %256 = arith.negf %255 : vector<8x128xf32>
    %257 = math.exp %256 : vector<8x128xf32>
    %cst_82 = arith.constant 1.000000e+00 : f32
    %258 = vector.broadcast %cst_82 : f32 to vector<8x128xf32>
    %259 = arith.addf %258, %257 : vector<8x128xf32>
    %260 = arith.divf %258, %259 : vector<8x128xf32>
    %261 = arith.mulf %252, %217 : vector<8x128xf32>
    %262 = arith.mulf %246, %254 : vector<8x128xf32>
    %263 = arith.addf %261, %262 : vector<8x128xf32>
    %264 = math.tanh %263 : vector<8x128xf32>
    %265 = arith.mulf %260, %264 : vector<8x128xf32>
    %c8_i32_83 = arith.constant 8 : i32
    %266 = arith.cmpi slt, %227, %c8_i32_83 : i32
    %267 = arith.select %266, %265, %216 : vector<8x128xf32>
    %268 = arith.select %266, %263, %217 : vector<8x128xf32>
    %269 = arith.maximumf %219, %265 : vector<8x128xf32>
    %270 = arith.select %266, %269, %219 : vector<8x128xf32>
    %271 = vector.broadcast %227 : i32 to vector<8x1xi32>
    %272 = arith.cmpi eq, %13, %271 : vector<8x1xi32>
    %273 = vector.shape_cast %272 : vector<8x1xi1> to vector<8x1xi1>
    %274 = vector.broadcast %273 : vector<8x1xi1> to vector<8x128xi1>
    %275 = arith.select %274, %265, %224 : vector<8x128xi1>, vector<8x128xf32>
    %c5_i32 = arith.constant 5 : i32
    %276 = arith.addi %14, %c5_i32 : i32
    %c7_i32_84 = arith.constant 7 : i32
    %277 = arith.subi %c7_i32_84, %276 : i32
    %278 = arith.select %0, %277, %276 : i32
    %c7_i32_85 = arith.constant 7 : i32
    %279 = arith.subi %c7_i32_85, %c5_i32 : i32
    %280 = arith.select %0, %279, %c5_i32 : i32
    %c8_i32_86 = arith.constant 8 : i32
    %281 = arith.muli %280, %c8_i32_86 : i32
    %282 = tpu.assume_multiple %281, 8 : i32
    %283 = arith.index_cast %282 : i32 to index
    %c0_87 = arith.constant 0 : index
    %284 = vector.load %arg9[%283, %c0_87] : memref<64x512xf32, #tpu.memory_space<vmem>>, vector<8x512xf32>
    %285 = arith.truncf %267 : vector<8x128xf32> to vector<8x128xbf16>
    %c0_88 = arith.constant 0 : index
    %c0_89 = arith.constant 0 : index
    %c0_90 = arith.constant 0 : index
    %286 = vector.load %arg5[%c0_88, %c0_89, %c0_90] : memref<1x128x512xbf16, #tpu.memory_space<vmem>>, vector<1x128x512xbf16>
    %287 = vector.shape_cast %286 : vector<1x128x512xbf16> to vector<128x512xbf16>
    %cst_91 = arith.constant dense<0.000000e+00> : vector<8x512xf32>
    %288 = tpu.matmul %285, %287, %cst_91 {dimension_numbers = #tpu.dot_dimension_numbers<[1], [0], [0], [1], [0, 0, 1, 1], [], []>} : vector<8x128xbf16>, vector<128x512xbf16>, vector<8x512xf32> -> vector<8x512xf32>
    %289 = arith.addf %284, %288 : vector<8x512xf32>
    %290 = vector.broadcast %10 : vector<1x512xf32> to vector<8x512xf32>
    %291 = arith.addf %289, %290 : vector<8x512xf32>
    %292 = vector.extract_strided_slice %291 {offsets = [0, 0], sizes = [8, 128], strides = [1, 1]} : vector<8x512xf32> to vector<8x128xf32>
    %293 = arith.negf %292 : vector<8x128xf32>
    %294 = math.exp %293 : vector<8x128xf32>
    %cst_92 = arith.constant 1.000000e+00 : f32
    %295 = vector.broadcast %cst_92 : f32 to vector<8x128xf32>
    %296 = arith.addf %295, %294 : vector<8x128xf32>
    %297 = arith.divf %295, %296 : vector<8x128xf32>
    %298 = vector.extract_strided_slice %291 {offsets = [0, 128], sizes = [8, 128], strides = [1, 1]} : vector<8x512xf32> to vector<8x128xf32>
    %299 = arith.negf %298 : vector<8x128xf32>
    %300 = math.exp %299 : vector<8x128xf32>
    %cst_93 = arith.constant 1.000000e+00 : f32
    %301 = vector.broadcast %cst_93 : f32 to vector<8x128xf32>
    %302 = arith.addf %301, %300 : vector<8x128xf32>
    %303 = arith.divf %301, %302 : vector<8x128xf32>
    %304 = vector.extract_strided_slice %291 {offsets = [0, 256], sizes = [8, 128], strides = [1, 1]} : vector<8x512xf32> to vector<8x128xf32>
    %305 = math.tanh %304 : vector<8x128xf32>
    %306 = vector.extract_strided_slice %291 {offsets = [0, 384], sizes = [8, 128], strides = [1, 1]} : vector<8x512xf32> to vector<8x128xf32>
    %307 = arith.negf %306 : vector<8x128xf32>
    %308 = math.exp %307 : vector<8x128xf32>
    %cst_94 = arith.constant 1.000000e+00 : f32
    %309 = vector.broadcast %cst_94 : f32 to vector<8x128xf32>
    %310 = arith.addf %309, %308 : vector<8x128xf32>
    %311 = arith.divf %309, %310 : vector<8x128xf32>
    %312 = arith.mulf %303, %268 : vector<8x128xf32>
    %313 = arith.mulf %297, %305 : vector<8x128xf32>
    %314 = arith.addf %312, %313 : vector<8x128xf32>
    %315 = math.tanh %314 : vector<8x128xf32>
    %316 = arith.mulf %311, %315 : vector<8x128xf32>
    %c8_i32_95 = arith.constant 8 : i32
    %317 = arith.cmpi slt, %278, %c8_i32_95 : i32
    %318 = arith.select %317, %316, %267 : vector<8x128xf32>
    %319 = arith.select %317, %314, %268 : vector<8x128xf32>
    %320 = arith.maximumf %270, %316 : vector<8x128xf32>
    %321 = arith.select %317, %320, %270 : vector<8x128xf32>
    %322 = vector.broadcast %278 : i32 to vector<8x1xi32>
    %323 = arith.cmpi eq, %13, %322 : vector<8x1xi32>
    %324 = vector.shape_cast %323 : vector<8x1xi1> to vector<8x1xi1>
    %325 = vector.broadcast %324 : vector<8x1xi1> to vector<8x128xi1>
    %326 = arith.select %325, %316, %275 : vector<8x128xi1>, vector<8x128xf32>
    %c6_i32 = arith.constant 6 : i32
    %327 = arith.addi %14, %c6_i32 : i32
    %c7_i32_96 = arith.constant 7 : i32
    %328 = arith.subi %c7_i32_96, %327 : i32
    %329 = arith.select %0, %328, %327 : i32
    %c7_i32_97 = arith.constant 7 : i32
    %330 = arith.subi %c7_i32_97, %c6_i32 : i32
    %331 = arith.select %0, %330, %c6_i32 : i32
    %c8_i32_98 = arith.constant 8 : i32
    %332 = arith.muli %331, %c8_i32_98 : i32
    %333 = tpu.assume_multiple %332, 8 : i32
    %334 = arith.index_cast %333 : i32 to index
    %c0_99 = arith.constant 0 : index
    %335 = vector.load %arg9[%334, %c0_99] : memref<64x512xf32, #tpu.memory_space<vmem>>, vector<8x512xf32>
    %336 = arith.truncf %318 : vector<8x128xf32> to vector<8x128xbf16>
    %c0_100 = arith.constant 0 : index
    %c0_101 = arith.constant 0 : index
    %c0_102 = arith.constant 0 : index
    %337 = vector.load %arg5[%c0_100, %c0_101, %c0_102] : memref<1x128x512xbf16, #tpu.memory_space<vmem>>, vector<1x128x512xbf16>
    %338 = vector.shape_cast %337 : vector<1x128x512xbf16> to vector<128x512xbf16>
    %cst_103 = arith.constant dense<0.000000e+00> : vector<8x512xf32>
    %339 = tpu.matmul %336, %338, %cst_103 {dimension_numbers = #tpu.dot_dimension_numbers<[1], [0], [0], [1], [0, 0, 1, 1], [], []>} : vector<8x128xbf16>, vector<128x512xbf16>, vector<8x512xf32> -> vector<8x512xf32>
    %340 = arith.addf %335, %339 : vector<8x512xf32>
    %341 = vector.broadcast %10 : vector<1x512xf32> to vector<8x512xf32>
    %342 = arith.addf %340, %341 : vector<8x512xf32>
    %343 = vector.extract_strided_slice %342 {offsets = [0, 0], sizes = [8, 128], strides = [1, 1]} : vector<8x512xf32> to vector<8x128xf32>
    %344 = arith.negf %343 : vector<8x128xf32>
    %345 = math.exp %344 : vector<8x128xf32>
    %cst_104 = arith.constant 1.000000e+00 : f32
    %346 = vector.broadcast %cst_104 : f32 to vector<8x128xf32>
    %347 = arith.addf %346, %345 : vector<8x128xf32>
    %348 = arith.divf %346, %347 : vector<8x128xf32>
    %349 = vector.extract_strided_slice %342 {offsets = [0, 128], sizes = [8, 128], strides = [1, 1]} : vector<8x512xf32> to vector<8x128xf32>
    %350 = arith.negf %349 : vector<8x128xf32>
    %351 = math.exp %350 : vector<8x128xf32>
    %cst_105 = arith.constant 1.000000e+00 : f32
    %352 = vector.broadcast %cst_105 : f32 to vector<8x128xf32>
    %353 = arith.addf %352, %351 : vector<8x128xf32>
    %354 = arith.divf %352, %353 : vector<8x128xf32>
    %355 = vector.extract_strided_slice %342 {offsets = [0, 256], sizes = [8, 128], strides = [1, 1]} : vector<8x512xf32> to vector<8x128xf32>
    %356 = math.tanh %355 : vector<8x128xf32>
    %357 = vector.extract_strided_slice %342 {offsets = [0, 384], sizes = [8, 128], strides = [1, 1]} : vector<8x512xf32> to vector<8x128xf32>
    %358 = arith.negf %357 : vector<8x128xf32>
    %359 = math.exp %358 : vector<8x128xf32>
    %cst_106 = arith.constant 1.000000e+00 : f32
    %360 = vector.broadcast %cst_106 : f32 to vector<8x128xf32>
    %361 = arith.addf %360, %359 : vector<8x128xf32>
    %362 = arith.divf %360, %361 : vector<8x128xf32>
    %363 = arith.mulf %354, %319 : vector<8x128xf32>
    %364 = arith.mulf %348, %356 : vector<8x128xf32>
    %365 = arith.addf %363, %364 : vector<8x128xf32>
    %366 = math.tanh %365 : vector<8x128xf32>
    %367 = arith.mulf %362, %366 : vector<8x128xf32>
    %c8_i32_107 = arith.constant 8 : i32
    %368 = arith.cmpi slt, %329, %c8_i32_107 : i32
    %369 = arith.select %368, %367, %318 : vector<8x128xf32>
    %370 = arith.select %368, %365, %319 : vector<8x128xf32>
    %371 = arith.maximumf %321, %367 : vector<8x128xf32>
    %372 = arith.select %368, %371, %321 : vector<8x128xf32>
    %373 = vector.broadcast %329 : i32 to vector<8x1xi32>
    %374 = arith.cmpi eq, %13, %373 : vector<8x1xi32>
    %375 = vector.shape_cast %374 : vector<8x1xi1> to vector<8x1xi1>
    %376 = vector.broadcast %375 : vector<8x1xi1> to vector<8x128xi1>
    %377 = arith.select %376, %367, %326 : vector<8x128xi1>, vector<8x128xf32>
    %c7_i32_108 = arith.constant 7 : i32
    %378 = arith.addi %14, %c7_i32_108 : i32
    %c7_i32_109 = arith.constant 7 : i32
    %379 = arith.subi %c7_i32_109, %378 : i32
    %380 = arith.select %0, %379, %378 : i32
    %c7_i32_110 = arith.constant 7 : i32
    %381 = arith.subi %c7_i32_110, %c7_i32_108 : i32
    %382 = arith.select %0, %381, %c7_i32_108 : i32
    %c8_i32_111 = arith.constant 8 : i32
    %383 = arith.muli %382, %c8_i32_111 : i32
    %384 = tpu.assume_multiple %383, 8 : i32
    %385 = arith.index_cast %384 : i32 to index
    %c0_112 = arith.constant 0 : index
    %386 = vector.load %arg9[%385, %c0_112] : memref<64x512xf32, #tpu.memory_space<vmem>>, vector<8x512xf32>
    %387 = arith.truncf %369 : vector<8x128xf32> to vector<8x128xbf16>
    %c0_113 = arith.constant 0 : index
    %c0_114 = arith.constant 0 : index
    %c0_115 = arith.constant 0 : index
    %388 = vector.load %arg5[%c0_113, %c0_114, %c0_115] : memref<1x128x512xbf16, #tpu.memory_space<vmem>>, vector<1x128x512xbf16>
    %389 = vector.shape_cast %388 : vector<1x128x512xbf16> to vector<128x512xbf16>
    %cst_116 = arith.constant dense<0.000000e+00> : vector<8x512xf32>
    %390 = tpu.matmul %387, %389, %cst_116 {dimension_numbers = #tpu.dot_dimension_numbers<[1], [0], [0], [1], [0, 0, 1, 1], [], []>} : vector<8x128xbf16>, vector<128x512xbf16>, vector<8x512xf32> -> vector<8x512xf32>
    %391 = arith.addf %386, %390 : vector<8x512xf32>
    %392 = vector.broadcast %10 : vector<1x512xf32> to vector<8x512xf32>
    %393 = arith.addf %391, %392 : vector<8x512xf32>
    %394 = vector.extract_strided_slice %393 {offsets = [0, 0], sizes = [8, 128], strides = [1, 1]} : vector<8x512xf32> to vector<8x128xf32>
    %395 = arith.negf %394 : vector<8x128xf32>
    %396 = math.exp %395 : vector<8x128xf32>
    %cst_117 = arith.constant 1.000000e+00 : f32
    %397 = vector.broadcast %cst_117 : f32 to vector<8x128xf32>
    %398 = arith.addf %397, %396 : vector<8x128xf32>
    %399 = arith.divf %397, %398 : vector<8x128xf32>
    %400 = vector.extract_strided_slice %393 {offsets = [0, 128], sizes = [8, 128], strides = [1, 1]} : vector<8x512xf32> to vector<8x128xf32>
    %401 = arith.negf %400 : vector<8x128xf32>
    %402 = math.exp %401 : vector<8x128xf32>
    %cst_118 = arith.constant 1.000000e+00 : f32
    %403 = vector.broadcast %cst_118 : f32 to vector<8x128xf32>
    %404 = arith.addf %403, %402 : vector<8x128xf32>
    %405 = arith.divf %403, %404 : vector<8x128xf32>
    %406 = vector.extract_strided_slice %393 {offsets = [0, 256], sizes = [8, 128], strides = [1, 1]} : vector<8x512xf32> to vector<8x128xf32>
    %407 = math.tanh %406 : vector<8x128xf32>
    %408 = vector.extract_strided_slice %393 {offsets = [0, 384], sizes = [8, 128], strides = [1, 1]} : vector<8x512xf32> to vector<8x128xf32>
    %409 = arith.negf %408 : vector<8x128xf32>
    %410 = math.exp %409 : vector<8x128xf32>
    %cst_119 = arith.constant 1.000000e+00 : f32
    %411 = vector.broadcast %cst_119 : f32 to vector<8x128xf32>
    %412 = arith.addf %411, %410 : vector<8x128xf32>
    %413 = arith.divf %411, %412 : vector<8x128xf32>
    %414 = arith.mulf %405, %370 : vector<8x128xf32>
    %415 = arith.mulf %399, %407 : vector<8x128xf32>
    %416 = arith.addf %414, %415 : vector<8x128xf32>
    %417 = math.tanh %416 : vector<8x128xf32>
    %418 = arith.mulf %413, %417 : vector<8x128xf32>
    %c8_i32_120 = arith.constant 8 : i32
    %419 = arith.cmpi slt, %380, %c8_i32_120 : i32
    %420 = arith.select %419, %418, %369 : vector<8x128xf32>
    %421 = arith.select %419, %416, %370 : vector<8x128xf32>
    %422 = arith.maximumf %372, %418 : vector<8x128xf32>
    %423 = arith.select %419, %422, %372 : vector<8x128xf32>
    %424 = vector.broadcast %380 : i32 to vector<8x1xi32>
    %425 = arith.cmpi eq, %13, %424 : vector<8x1xi32>
    %426 = vector.shape_cast %425 : vector<8x1xi1> to vector<8x1xi1>
    %427 = vector.broadcast %426 : vector<8x1xi1> to vector<8x128xi1>
    %428 = arith.select %427, %418, %377 : vector<8x128xi1>, vector<8x128xf32>
    %c8_i32_121 = arith.constant 8 : i32
    %c0_122 = arith.constant 0 : index
    %c0_123 = arith.constant 0 : index
    %429 = vector.load %arg10[%c0_122, %c0_123] : memref<8x128xf32, #tpu.memory_space<vmem>>, vector<8x128xf32>
    tpu.vector_store %arg10[%c0_122, %c0_123], %420 {strides = array<i32>} : memref<8x128xf32, #tpu.memory_space<vmem>>, vector<8x128xf32>,
    %c0_124 = arith.constant 0 : index
    %c0_125 = arith.constant 0 : index
    %430 = vector.load %arg11[%c0_124, %c0_125] : memref<8x128xf32, #tpu.memory_space<vmem>>, vector<8x128xf32>
    tpu.vector_store %arg11[%c0_124, %c0_125], %421 {strides = array<i32>} : memref<8x128xf32, #tpu.memory_space<vmem>>, vector<8x128xf32>,
    %c0_126 = arith.constant 0 : index
    %c0_127 = arith.constant 0 : index
    %c0_128 = arith.constant 0 : index
    %431 = vector.load %arg7[%c0_126, %c0_127, %c0_128] : memref<1x8x128xf32, #tpu.memory_space<vmem>>, vector<1x8x128xf32>
    %432 = vector.shape_cast %431 : vector<1x8x128xf32> to vector<8x128xf32>
    %433 = vector.shape_cast %423 : vector<8x128xf32> to vector<1x8x128xf32>
    tpu.vector_store %arg7[%c0_126, %c0_127, %c0_128], %433 {strides = array<i32>} : memref<1x8x128xf32, #tpu.memory_space<vmem>>, vector<1x8x128xf32>,
    %c0_129 = arith.constant 0 : index
    %c0_130 = arith.constant 0 : index
    %c0_131 = arith.constant 0 : index
    %434 = vector.load %arg8[%c0_129, %c0_130, %c0_131] : memref<1x8x128xf32, #tpu.memory_space<vmem>>, vector<1x8x128xf32>
    %435 = vector.shape_cast %434 : vector<1x8x128xf32> to vector<8x128xf32>
    %436 = vector.shape_cast %428 : vector<8x128xf32> to vector<1x8x128xf32>
    tpu.vector_store %arg8[%c0_129, %c0_130, %c0_131], %436 {strides = array<i32>} : memref<1x8x128xf32, #tpu.memory_space<vmem>>, vector<1x8x128xf32>,
    return
  }
  func.func @transform_0(%arg0: i32, %arg1: i32) -> (i32, i32) {
    %c2_i32 = arith.constant 2 : i32
    %0 = arith.muli %c2_i32, %arg1 : i32
    %c0_i32 = arith.constant 0 : i32
    %1 = arith.subi %c0_i32, %0 : i32
    %2 = arith.muli %arg0, %1 : i32
    %3 = arith.addi %arg1, %2 : i32
    %c0_i32_0 = arith.constant 0 : i32
    %c0_i32_1 = arith.constant 0 : i32
    return %3, %c0_i32_0 : i32, i32
  }
  func.func @transform_1(%arg0: i32, %arg1: i32) -> (i32, i32) {
    %c0_i32 = arith.constant 0 : i32
    %c0_i32_0 = arith.constant 0 : i32
    %c0_i32_1 = arith.constant 0 : i32
    return %c0_i32, %c0_i32_0 : i32, i32
  }
  func.func @transform_2(%arg0: i32, %arg1: i32) -> (i32, i32, i32) {
    %c0_i32 = arith.constant 0 : i32
    %c0_i32_0 = arith.constant 0 : i32
    %c0_i32_1 = arith.constant 0 : i32
    return %arg0, %c0_i32, %c0_i32_0 : i32, i32, i32
  }
  func.func @transform_3(%arg0: i32, %arg1: i32) -> (i32, i32, i32) {
    %c0_i32 = arith.constant 0 : i32
    %c0_i32_0 = arith.constant 0 : i32
    %c0_i32_1 = arith.constant 0 : i32
    return %arg0, %c0_i32, %c0_i32_0 : i32, i32, i32
  }
  func.func @transform_4(%arg0: i32, %arg1: i32) -> (i32, i32, i32) {
    %c0_i32 = arith.constant 0 : i32
    %c0_i32_0 = arith.constant 0 : i32
    %c0_i32_1 = arith.constant 0 : i32
    return %arg0, %c0_i32, %c0_i32_0 : i32, i32, i32
  }
  func.func @transform_5(%arg0: i32, %arg1: i32) -> (i32, i32, i32) {
    %c0_i32 = arith.constant 0 : i32
    %c0_i32_0 = arith.constant 0 : i32
    %c0_i32_1 = arith.constant 0 : i32
    return %arg0, %c0_i32, %c0_i32_0 : i32, i32, i32
  }
  func.func @transform_6(%arg0: i32, %arg1: i32) -> (i32, i32, i32) {
    %c0_i32 = arith.constant 0 : i32
    %c0_i32_0 = arith.constant 0 : i32
    %c0_i32_1 = arith.constant 0 : i32
    return %arg0, %c0_i32, %c0_i32_0 : i32, i32, i32
  }
}

</mosaic_0001>

<llo_original>
// kernel: tpu_custom_call.1
$region0: #{tpu_custom_call.1}
  #allocation0 [shape = 'u32[]', space=smem, size = 0x4, offset = 0x4, fixed_abs, tag = 'smem constant byte address 0x4 - core index']
  #allocation1 [shape = 'u32[72,128]{1,0:T(1,128)}', space=vmem, size = 0x9000, scoped, tag = 'internal scratch']
  #allocation2 [shape = 'f32[64,512]{1,0:T(8,128)}', space=vmem, size = 0x20000, scoped, tag = 'scratch operand']
  #allocation3 [shape = 'f32[8,128]{1,0:T(8,128)}', space=vmem, size = 0x1000, scoped, tag = 'scratch operand']
  #allocation4 [shape = 'f32[8,128]{1,0:T(8,128)}', space=vmem, size = 0x1000, scoped, tag = 'scratch operand']
  %s0 = inlined_call_operand.hbm [shape: bf16[64,128], index: 0, kind: input, shape index: {}]
  %s1 = inlined_call_operand.vmem [shape: s32[8,1], index: 1, kind: input, shape index: {}]
  %s2 = inlined_call_operand.hbm [shape: bf16[2,128,512], index: 2, kind: input, shape index: {}]
  %s3 = inlined_call_operand.hbm [shape: bf16[2,128,512], index: 3, kind: input, shape index: {}]
  %s4 = inlined_call_operand.vmem [shape: f32[2,1,512], index: 4, kind: input, shape index: {}]
  %s5 = inlined_call_operand.hbm [shape: f32[2,8,128], index: 5, kind: output, shape index: {0}]
  %s6 = inlined_call_operand.hbm [shape: f32[2,8,128], index: 6, kind: output, shape index: {1}]
  %7 = xla_tuple %s5, %s6
  %s8 = sld [smem:[#allocation0]]
  $region77: #{tpu_custom_call.1} parent=0
    _
  %s10 = ssub.s32 1, %s8
  %s11 = scalar_select 0, %s10, %s8
  $region1: #{tpu_custom_call.1} parent=0
    #allocation5 [shape = 'u8[32768]{0}', space=vmem, size = 0x8000, scoped, tag = 'input window, operand 0']
    #allocation6 [shape = 's32[2]{0}', space=sflag, size = 0x8, scoped, tag = 'scoped memory for tpu_custom_call.1']
    #allocation7 [shape = 's32[2]{0}', space=sflag, size = 0x8, scoped, tag = 'scoped memory for tpu_custom_call.1']
    #allocation8 [shape = 'u8[262144]{0}', space=vmem, size = 0x40000, scoped, tag = 'input window, operand 2']
    #allocation9 [shape = 's32[2]{0}', space=sflag, size = 0x8, scoped, tag = 'scoped memory for tpu_custom_call.1']
    #allocation10 [shape = 'u8[262144]{0}', space=vmem, size = 0x40000, scoped, tag = 'input window, operand 3']
    #allocation11 [shape = 'u8[8192]{0}', space=vmem, size = 0x2000, scoped, tag = 'output window, operand 0']
    #allocation12 [shape = 'u8[8192]{0}', space=vmem, size = 0x2000, scoped, tag = 'output window, operand 1']
    #allocation13 [shape = 's32[2]{0}', space=sflag, size = 0x8, scoped, tag = 'scoped memory for tpu_custom_call.1']
    %12 = vsyncpa [#allocation6], 0
    %s13 = scalar_lea.sflag [#allocation6], 1
    %14 = vsyncpa %s13, 0
    %15 = vsyncpa [#allocation9], 0
    %s16 = scalar_lea.sflag [#allocation9], 1
    %17 = vsyncpa %s16, 0
    %18 = vsyncpa [#allocation7], 0
    %s19 = scalar_lea.sflag [#allocation7], 1
    %20 = vsyncpa %s19, 0
    %21 = vsyncpa [#allocation13], 0
    %s22 = scalar_lea.sflag [#allocation13], 1
    %23 = vsyncpa %s22, 0
    loop: start=0, step=1, limit=4
    $region2: #{tpu_custom_call.1} parent=1 // loop_pre_header
      _
    $region3: #{tpu_custom_call.1} parent=1 // loop_header
      %s25 = sphi 0, %s29
      %p26 = scmp.ge.s32.totalorder %s25, 4
      %s32 = sphi 0, %s44
      %s33 = sphi 0, %s40
      %s34 = sphi 0, %s32
      %s35 = sphi 0, %s33
      %s36 = sphi 0, %s34
      %s37 = sphi 0, %s35
      %s55 = sphi 0, %s57
      %s58 = sphi 0, %s55
      %s59 = sphi 0, %s58
      %s75 = sphi 0, %s59
      %s79 = sphi 0, %s79
      %s81 = sphi 0, %s79
      %s82 = sphi 0, %s81
      %s96 = sphi 0, %s82
      %s102 = sphi 0, %s104
      %s105 = sphi 0, %s102
      %s106 = sphi 0, %s105
      %s122 = sphi 0, %s106
      %s128 = sphi 0, %s130
      %s131 = sphi 0, %s128
      %s132 = sphi 0, %s131
      %s148 = sphi 0, %s132
      %s154 = sphi 0, %s156
      %s157 = sphi 0, %s154
      %s158 = sphi 0, %s157
      %s174 = sphi 0, %s158
      %s180 = sphi 0, %s182
      %s183 = sphi 0, %s180
      %s184 = sphi 0, %s183
      %s200 = sphi 0, %s184
      %s206 = sphi 0, %s208
      %s209 = sphi 0, %s206
      %s210 = sphi 0, %s209
      %s226 = sphi 0, %s210
    $region4: #{tpu_custom_call.1} parent=1 // loop_header_branch
      %28 = sbr.rel (%p26) target = $region8
    $region5: #{tpu_custom_call.1} parent=1 // loop_body
      %s30 = ssub.s32 %s25, 1
      %s31 = ssub.s32 %s25, 2
      %s38 = sadd.s32 1, %s33
      %p39 = scmp.ge.s32.totalorder %s38, 1
      %s40 = scalar_select %p39, 0, %s38
      %s41 = sadd.s32 1, %s32
      %s42 = scalar_select %p39, %s41, %s32
      %p43 = scmp.ge.s32.totalorder %s42, 2
      %s44 = scalar_select %p43, 0, %s42
      %s45 = smul.u32 %s33, 2
      %s46 = ssub.s32 0, %s45
      %s47 = smul.u32 %s32, %s46
      %s48 = sadd.s32 %s33, %s47
      %s49 = smul.u32 %s40, 2
      %s50 = ssub.s32 0, %s49
      %s51 = smul.u32 %s44, %s50
      %s52 = sadd.s32 %s40, %s51
      %s53 = ssub.s32 %s48, %s52
      %p54 = scmp.eq.s32.totalorder %s53, 0
      %s56 = sadd.s32 %s55, 1
      %s57 = scalar_select %p54, %s55, %s56
      %p60 = pneg %p54
      %p61 = scmp.eq.s32.totalorder %s25, 1
      %p62 = por %p60, %p61
      %p63 = scmp.ne.s32.totalorder %s55, %s58
      %p64 = scmp.eq.s32.totalorder %s25, 0
      %p65 = por %p63, %p64
      %p66 = scmp.ne.s32.totalorder %s55, %s58
      %p67 = scmp.eq.s32.totalorder %s30, 1
      %p68 = por %p66, %p67
      %p69 = scmp.ne.s32.totalorder %s58, %s59
      %p70 = scmp.eq.s32.totalorder %s30, 0
      %p71 = por %p69, %p70
      %p72 = scmp.ne.s32.totalorder %s58, %s59
      %p73 = scmp.eq.s32.totalorder %s31, 1
      %p74 = por %p72, %p73
      %p76 = scmp.ne.s32.totalorder %s59, %s75
      %p77 = scmp.eq.s32.totalorder %s31, 0
      %p78 = por %p76, %p77
      %s80 = sadd.s32 %s79, 1
      %p83 = scmp.eq.s32.totalorder %s25, 1
      %p84 = scmp.ne.s32.totalorder %s79, %s81
      %p85 = scmp.eq.s32.totalorder %s25, 0
      %p86 = por %p84, %p85
      %p87 = scmp.ne.s32.totalorder %s79, %s81
      %p88 = scmp.eq.s32.totalorder %s30, 1
      %p89 = por %p87, %p88
      %p90 = scmp.ne.s32.totalorder %s81, %s82
      %p91 = scmp.eq.s32.totalorder %s30, 0
      %p92 = por %p90, %p91
      %p93 = scmp.ne.s32.totalorder %s81, %s82
      %p94 = scmp.eq.s32.totalorder %s31, 1
      %p95 = por %p93, %p94
      %p97 = scmp.ne.s32.totalorder %s82, %s96
      %p98 = scmp.eq.s32.totalorder %s31, 0
      %p99 = por %p97, %p98
      %s100 = ssub.s32 %s32, %s44
      %p101 = scmp.eq.s32.totalorder %s100, 0
      %s103 = sadd.s32 %s102, 1
      %s104 = scalar_select %p101, %s102, %s103
      %p107 = pneg %p101
      %p108 = scmp.eq.s32.totalorder %s25, 1
      %p109 = por %p107, %p108
      %p110 = scmp.ne.s32.totalorder %s102, %s105
      %p111 = scmp.eq.s32.totalorder %s25, 0
      %p112 = por %p110, %p111
      %p113 = scmp.ne.s32.totalorder %s102, %s105
      %p114 = scmp.eq.s32.totalorder %s30, 1
      %p115 = por %p113, %p114
      %p116 = scmp.ne.s32.totalorder %s105, %s106
      %p117 = scmp.eq.s32.totalorder %s30, 0
      %p118 = por %p116, %p117
      %p119 = scmp.ne.s32.totalorder %s105, %s106
      %p120 = scmp.eq.s32.totalorder %s31, 1
      %p121 = por %p119, %p120
      %p123 = scmp.ne.s32.totalorder %s106, %s122
      %p124 = scmp.eq.s32.totalorder %s31, 0
      %p125 = por %p123, %p124
      %s126 = ssub.s32 %s32, %s44
      %p127 = scmp.eq.s32.totalorder %s126, 0
      %s129 = sadd.s32 %s128, 1
      %s130 = scalar_select %p127, %s128, %s129
      %p133 = pneg %p127
      %p134 = scmp.eq.s32.totalorder %s25, 1
      %p135 = por %p133, %p134
      %p136 = scmp.ne.s32.totalorder %s128, %s131
      %p137 = scmp.eq.s32.totalorder %s25, 0
      %p138 = por %p136, %p137
      %p139 = scmp.ne.s32.totalorder %s128, %s131
      %p140 = scmp.eq.s32.totalorder %s30, 1
      %p141 = por %p139, %p140
      %p142 = scmp.ne.s32.totalorder %s131, %s132
      %p143 = scmp.eq.s32.totalorder %s30, 0
      %p144 = por %p142, %p143
      %p145 = scmp.ne.s32.totalorder %s131, %s132
      %p146 = scmp.eq.s32.totalorder %s31, 1
      %p147 = por %p145, %p146
      %p149 = scmp.ne.s32.totalorder %s132, %s148
      %p150 = scmp.eq.s32.totalorder %s31, 0
      %p151 = por %p149, %p150
      %s152 = ssub.s32 %s32, %s44
      %p153 = scmp.eq.s32.totalorder %s152, 0
      %s155 = sadd.s32 %s154, 1
      %s156 = scalar_select %p153, %s154, %s155
      %p159 = pneg %p153
      %p160 = scmp.eq.s32.totalorder %s25, 1
      %p161 = por %p159, %p160
      %p162 = scmp.ne.s32.totalorder %s154, %s157
      %p163 = scmp.eq.s32.totalorder %s25, 0
      %p164 = por %p162, %p163
      %p165 = scmp.ne.s32.totalorder %s154, %s157
      %p166 = scmp.eq.s32.totalorder %s30, 1
      %p167 = por %p165, %p166
      %p168 = scmp.ne.s32.totalorder %s157, %s158
      %p169 = scmp.eq.s32.totalorder %s30, 0
      %p170 = por %p168, %p169
      %p171 = scmp.ne.s32.totalorder %s157, %s158
      %p172 = scmp.eq.s32.totalorder %s31, 1
      %p173 = por %p171, %p172
      %p175 = scmp.ne.s32.totalorder %s158, %s174
      %p176 = scmp.eq.s32.totalorder %s31, 0
      %p177 = por %p175, %p176
      %s178 = ssub.s32 %s32, %s44
      %p179 = scmp.eq.s32.totalorder %s178, 0
      %s181 = sadd.s32 %s180, 1
      %s182 = scalar_select %p179, %s180, %s181
      %p185 = pneg %p179
      %p186 = scmp.eq.s32.totalorder %s25, 1
      %p187 = por %p185, %p186
      %p188 = scmp.ne.s32.totalorder %s180, %s183
      %p189 = scmp.eq.s32.totalorder %s25, 0
      %p190 = por %p188, %p189
      %p191 = scmp.ne.s32.totalorder %s180, %s183
      %p192 = scmp.eq.s32.totalorder %s30, 1
      %p193 = por %p191, %p192
      %p194 = scmp.ne.s32.totalorder %s183, %s184
      %p195 = scmp.eq.s32.totalorder %s30, 0
      %p196 = por %p194, %p195
      %p197 = scmp.ne.s32.totalorder %s183, %s184
      %p198 = scmp.eq.s32.totalorder %s31, 1
      %p199 = por %p197, %p198
      %p201 = scmp.ne.s32.totalorder %s184, %s200
      %p202 = scmp.eq.s32.totalorder %s31, 0
      %p203 = por %p201, %p202
      %s204 = ssub.s32 %s32, %s44
      %p205 = scmp.eq.s32.totalorder %s204, 0
      %s207 = sadd.s32 %s206, 1
      %s208 = scalar_select %p205, %s206, %s207
      %p211 = pneg %p205
      %p212 = scmp.eq.s32.totalorder %s25, 1
      %p213 = por %p211, %p212
      %p214 = scmp.ne.s32.totalorder %s206, %s209
      %p215 = scmp.eq.s32.totalorder %s25, 0
      %p216 = por %p214, %p215
      %p217 = scmp.ne.s32.totalorder %s206, %s209
      %p218 = scmp.eq.s32.totalorder %s30, 1
      %p219 = por %p217, %p218
      %p220 = scmp.ne.s32.totalorder %s209, %s210
      %p221 = scmp.eq.s32.totalorder %s30, 0
      %p222 = por %p220, %p221
      %p223 = scmp.ne.s32.totalorder %s209, %s210
      %p224 = scmp.eq.s32.totalorder %s31, 1
      %p225 = por %p223, %p224
      %p227 = scmp.ne.s32.totalorder %s210, %s226
      %p228 = scmp.eq.s32.totalorder %s31, 0
      %p229 = por %p227, %p228
      %p230 = scmp.le.s32.totalorder 1, %s25
      %p231 = scmp.lt.s32.totalorder %s25, 3
      %p232 = pnand %p230, %p231
      %p233 = pneg %p232
      // Predicated region
      $region9: #{tpu_custom_call.1} parent=5 // pred_check
        _
      $region10: #{tpu_custom_call.1} parent=5 // pred_check_branch
        %235 = sbr.rel (%p232) target = $region12
      $region11: #{tpu_custom_call.1} parent=5 // pred_region
        %s236 = ssub.s32 %s25, 1
        // Predicated region
        $region13: #{tpu_custom_call.1} parent=11 // pred_check
          %p237 = pneg %p92
        $region14: #{tpu_custom_call.1} parent=11 // pred_check_branch
          %239 = sbr.rel (%p237) target = $region16
        $region15: #{tpu_custom_call.1} parent=11 // pred_region
          _
        $region16: #{tpu_custom_call.1} parent=11 // pred_fallthru
          _
      $region12: #{tpu_custom_call.1} parent=5 // pred_fallthru
        _
      %p240 = scmp.lt.s32.totalorder %s25, 2
      // Predicated region
      $region17: #{tpu_custom_call.1} parent=5 // pred_check
        %p241 = pneg %p240
      $region18: #{tpu_custom_call.1} parent=5 // pred_check_branch
        %243 = sbr.rel (%p241) target = $region20
      $region19: #{tpu_custom_call.1} parent=5 // pred_region
        // Predicated region
        $region21: #{tpu_custom_call.1} parent=19 // pred_check
          %p244 = pneg %p65
        $region22: #{tpu_custom_call.1} parent=19 // pred_check_branch
          %246 = sbr.rel (%p244) target = $region24
        $region23: #{tpu_custom_call.1} parent=19 // pred_region
          %s247 = sand.u32 %s55, 1
          %s248 = scalar_lea.sflag [#allocation6], %s247
          %s249 = sand.u32 %s55, 1
          %s250 = smul.addr %s249, 32
          %s251 = scalar_lea.vmem [#allocation5], %s250
          %s252 = smul.u32 %s33, 2
          %s253 = ssub.s32 0, %s252
          %s254 = smul.u32 %s32, %s253
          %s255 = sadd.s32 %s33, %s254
          %s256 = smul.u32 8, %s255
          %258 = vsyncadd %s248, 0
          %s259 = smul.addr %s256, 4
          %s260 = scalar_lea.hbm %s0, %s259
          %s261 = sshll.u32 %s260, 4
          %s262 = int_to_ptr.hbm [resolvable:$true] %s261
          %s263 = sshll.u32 %s251, 4
          %s264 = int_to_ptr.vmem [resolvable:$true] %s263
          %269 = dma.hbm_to_vmem [thread:$0]  %s262, 512, %s264, %s248, 64, 64, 4
        $region24: #{tpu_custom_call.1} parent=19 // pred_fallthru
          _
        // Predicated region
        $region25: #{tpu_custom_call.1} parent=19 // pred_check
          %p270 = pneg %p112
        $region26: #{tpu_custom_call.1} parent=19 // pred_check_branch
          %272 = sbr.rel (%p270) target = $region28
        $region27: #{tpu_custom_call.1} parent=19 // pred_region
          %s273 = sand.u32 %s25, 1
          %s274 = scalar_lea.sflag [#allocation9], %s273
          %s275 = sand.u32 %s102, 1
          %s276 = smul.addr %s275, 256
          %s277 = scalar_lea.vmem [#allocation8], %s276
          %279 = vsyncadd %s274, 0
          %s280 = smul.addr %s32, 64
          %s281 = smul.addr %s280, 4
          %s282 = scalar_lea.hbm %s2, %s281
          %s283 = sshll.u32 %s282, 4
          %s284 = int_to_ptr.hbm [resolvable:$true] %s283
          %s285 = sshll.u32 %s277, 4
          %s286 = int_to_ptr.vmem [resolvable:$true] %s285
          %291 = dma.hbm_to_vmem [thread:$0]  %s284, 4096, %s286, %s274, 256, 256, 16
        $region28: #{tpu_custom_call.1} parent=19 // pred_fallthru
          _
        // Predicated region
        $region29: #{tpu_custom_call.1} parent=19 // pred_check
          %p292 = pneg %p138
        $region30: #{tpu_custom_call.1} parent=19 // pred_check_branch
          %294 = sbr.rel (%p292) target = $region32
        $region31: #{tpu_custom_call.1} parent=19 // pred_region
          %s295 = sand.u32 %s25, 1
          %s296 = scalar_lea.sflag [#allocation9], %s295
          %s297 = sand.u32 %s128, 1
          %s298 = smul.addr %s297, 256
          %s299 = scalar_lea.vmem [#allocation10], %s298
          %301 = vsyncadd %s296, 0
          %s302 = smul.addr %s32, 64
          %s303 = smul.addr %s302, 4
          %s304 = scalar_lea.hbm %s3, %s303
          %s305 = sshll.u32 %s304, 4
          %s306 = int_to_ptr.hbm [resolvable:$true] %s305
          %s307 = sshll.u32 %s299, 4
          %s308 = int_to_ptr.vmem [resolvable:$true] %s307
          %313 = dma.hbm_to_vmem [thread:$0]  %s306, 4096, %s308, %s296, 256, 256, 16
        $region32: #{tpu_custom_call.1} parent=19 // pred_fallthru
          _
        // Predicated region
        $region33: #{tpu_custom_call.1} parent=19 // pred_check
          %p314 = pneg %p164
        $region34: #{tpu_custom_call.1} parent=19 // pred_check_branch
          %316 = sbr.rel (%p314) target = $region36
        $region35: #{tpu_custom_call.1} parent=19 // pred_region
          %p317 = scmp.lt.s32.totalorder %s32, 1
          %s318 = scalar_select %p317, %s32, 1
          %s319 = smul.addr %s318, 4
          %s320 = scalar_lea.vmem %s4, %s319
        $region36: #{tpu_custom_call.1} parent=19 // pred_fallthru
          _
      $region20: #{tpu_custom_call.1} parent=5 // pred_fallthru
        _
      %p321 = scmp.le.s32.totalorder 1, %s25
      %p322 = scmp.lt.s32.totalorder %s25, 3
      %p323 = pnand %p321, %p322
      %p324 = pneg %p323
      // Predicated region
      $region37: #{tpu_custom_call.1} parent=5 // pred_check
        _
      $region38: #{tpu_custom_call.1} parent=5 // pred_check_branch
        %326 = sbr.rel (%p323) target = $region40
      $region39: #{tpu_custom_call.1} parent=5 // pred_region
        %s327 = ssub.s32 %s25, 1
        %s328 = sand.u32 %s58, 1
        %s329 = scalar_lea.sflag [#allocation6], %s328
        %s330 = sand.u32 %s58, 1
        %s331 = smul.addr %s330, 32
        %s332 = scalar_lea.vmem [#allocation5], %s331
        // Predicated region
        $region41: #{tpu_custom_call.1} parent=39 // pred_check
          %p333 = pneg %p71
        $region42: #{tpu_custom_call.1} parent=39 // pred_check_branch
          %335 = sbr.rel (%p333) target = $region44
        $region43: #{tpu_custom_call.1} parent=39 // pred_region
          %337 = dma.done %s329, 512
        $region44: #{tpu_custom_call.1} parent=39 // pred_fallthru
          _
        %s338 = sand.u32 %s30, 1
        %s339 = scalar_lea.sflag [#allocation9], %s338
        %s340 = sand.u32 %s105, 1
        %s341 = smul.addr %s340, 256
        %s342 = scalar_lea.vmem [#allocation8], %s341
        // Predicated region
        $region45: #{tpu_custom_call.1} parent=39 // pred_check
          %p343 = pneg %p118
        $region46: #{tpu_custom_call.1} parent=39 // pred_check_branch
          %345 = sbr.rel (%p343) target = $region48
        $region47: #{tpu_custom_call.1} parent=39 // pred_region
          %347 = dma.done %s339, 4096
        $region48: #{tpu_custom_call.1} parent=39 // pred_fallthru
          _
        %s348 = sand.u32 %s30, 1
        %s349 = scalar_lea.sflag [#allocation9], %s348
        %s350 = sand.u32 %s131, 1
        %s351 = smul.addr %s350, 256
        %s352 = scalar_lea.vmem [#allocation10], %s351
        // Predicated region
        $region49: #{tpu_custom_call.1} parent=39 // pred_check
          %p353 = pneg %p144
        $region50: #{tpu_custom_call.1} parent=39 // pred_check_branch
          %355 = sbr.rel (%p353) target = $region52
        $region51: #{tpu_custom_call.1} parent=39 // pred_region
          %357 = dma.done %s349, 4096
        $region52: #{tpu_custom_call.1} parent=39 // pred_fallthru
          _
        %s358 = sand.u32 %s58, 1
        %s359 = scalar_lea.sflag [#allocation6], %s358
        %s360 = sand.u32 %s58, 1
        %s361 = smul.addr %s360, 32
        %s362 = scalar_lea.vmem [#allocation5], %s361
        %p363 = pneg %p71
        %p364 = pneg %p68
        %p365 = pneg %p92
        %p366 = pneg %p89
        %s367 = sand.u32 %s30, 1
        %s368 = scalar_lea.sflag [#allocation9], %s367
        %s369 = sand.u32 %s105, 1
        %s370 = smul.addr %s369, 256
        %s371 = scalar_lea.vmem [#allocation8], %s370
        %p372 = pneg %p118
        %p373 = pneg %p115
        %s374 = sand.u32 %s30, 1
        %s375 = scalar_lea.sflag [#allocation9], %s374
        %s376 = sand.u32 %s131, 1
        %s377 = smul.addr %s376, 256
        %s378 = scalar_lea.vmem [#allocation10], %s377
        %p379 = pneg %p144
        %p380 = pneg %p141
        %p381 = scmp.lt.s32.totalorder %s34, 1
        %s382 = scalar_select %p381, %s34, 1
        %s383 = smul.addr %s382, 4
        %s384 = scalar_lea.vmem %s4, %s383
        %p385 = pneg %p170
        %p386 = pneg %p167
        %p387 = pneg %p196
        %p388 = pneg %p193
        %s389 = sand.u32 %s183, 1
        %s390 = scalar_lea.sflag [#allocation7], %s389
        %s391 = sand.u32 %s183, 1
        %s392 = smul.addr %s391, 8
        %s393 = scalar_lea.vmem [#allocation11], %s392
        %p394 = pneg %p222
        %p395 = pneg %p219
        %s396 = sand.u32 %s209, 1
        %s397 = scalar_lea.sflag [#allocation13], %s396
        %s398 = sand.u32 %s209, 1
        %s399 = smul.addr %s398, 8
        %s400 = scalar_lea.vmem [#allocation12], %s399
        %s401 = smul.u32 %s35, 2
        %s402 = ssub.s32 0, %s401
        %s403 = smul.u32 %s34, %s402
        %s404 = sadd.s32 %s35, %s403
        %s405 = smul.u32 8, %s404
        %p406 = scmp.lt.s32.totalorder %s34, 1
        %s407 = scalar_select %p406, %s34, 1
        %s408 = smul.addr %s407, 4
        %s409 = scalar_lea.vmem %s4, %s408
        %p410 = scmp.eq.s32.totalorder %s34, 1
        %p411 = scmp.eq.s32.totalorder %s35, 0
        // Predicated region
        $region53: #{tpu_custom_call.1} parent=39 // pred_check
          %p412 = pneg %p411
        $region54: #{tpu_custom_call.1} parent=39 // pred_check_branch
          %414 = sbr.rel (%p412) target = $region56
        $region55: #{tpu_custom_call.1} parent=39 // pred_region
          %415 = vst [vmem:[#allocation3] sm:$0xff] 0.0
          %416 = vst [vmem:[#allocation4] sm:$0xff] 0.0
          %417 = vst [vmem:[%s400] sm:$0xff] 0.0
          %418 = vst [vmem:[%s393] sm:$0xff] -inf
        $region56: #{tpu_custom_call.1} parent=39 // pred_fallthru
          _
        %v419 = vld [vmem:[%s332] sm:$0xf]
        %v420 = vld [vmem:[%s332 + $0x4] sm:$0xf]
        %v421 = vld [vmem:[%s332 + $0x8] sm:$0xf]
        %v422 = vld [vmem:[%s332 + $0xc] sm:$0xf]
        %v423 = vld [vmem:[%s332 + $0x10] sm:$0xf]
        %v424 = vld [vmem:[%s332 + $0x14] sm:$0xf]
        %v425 = vld [vmem:[%s332 + $0x18] sm:$0xf]
        %v426 = vld [vmem:[%s332 + $0x1c] sm:$0xf]
        %v427 = vld [vmem:[%s342] sm:$0xff]
        %v428 = vld [vmem:[%s342 + $0x8] sm:$0xff]
        %v429 = vld [vmem:[%s342 + $0x10] sm:$0xff]
        %v430 = vld [vmem:[%s342 + $0x18] sm:$0xff]
        %v431 = vld [vmem:[%s342 + $0x20] sm:$0xff]
        %v432 = vld [vmem:[%s342 + $0x28] sm:$0xff]
        %v433 = vld [vmem:[%s342 + $0x30] sm:$0xff]
        %v434 = vld [vmem:[%s342 + $0x38] sm:$0xff]
        %v435 = vld [vmem:[%s342 + $0x40] sm:$0xff]
        %v436 = vld [vmem:[%s342 + $0x48] sm:$0xff]
        %v437 = vld [vmem:[%s342 + $0x50] sm:$0xff]
        %v438 = vld [vmem:[%s342 + $0x58] sm:$0xff]
        %v439 = vld [vmem:[%s342 + $0x60] sm:$0xff]
        %v440 = vld [vmem:[%s342 + $0x68] sm:$0xff]
        %v441 = vld [vmem:[%s342 + $0x70] sm:$0xff]
        %v442 = vld [vmem:[%s342 + $0x78] sm:$0xff]
        %v443 = vld [vmem:[%s342 + $0x80] sm:$0xff]
        %v444 = vld [vmem:[%s342 + $0x88] sm:$0xff]
        %v445 = vld [vmem:[%s342 + $0x90] sm:$0xff]
        %v446 = vld [vmem:[%s342 + $0x98] sm:$0xff]
        %v447 = vld [vmem:[%s342 + $0xa0] sm:$0xff]
        %v448 = vld [vmem:[%s342 + $0xa8] sm:$0xff]
        %v449 = vld [vmem:[%s342 + $0xb0] sm:$0xff]
        %v450 = vld [vmem:[%s342 + $0xb8] sm:$0xff]
        %v451 = vld [vmem:[%s342 + $0xc0] sm:$0xff]
        %v452 = vld [vmem:[%s342 + $0xc8] sm:$0xff]
        %v453 = vld [vmem:[%s342 + $0xd0] sm:$0xff]
        %v454 = vld [vmem:[%s342 + $0xd8] sm:$0xff]
        %v455 = vld [vmem:[%s342 + $0xe0] sm:$0xff]
        %v456 = vld [vmem:[%s342 + $0xe8] sm:$0xff]
        %v457 = vld [vmem:[%s342 + $0xf0] sm:$0xff]
        %v458 = vld [vmem:[%s342 + $0xf8] sm:$0xff]
        %v467 = vunpack.c.l.b16 %v419
        %v468 = vunpack.c.l.b16 %v420
        %v469 = vunpack.c.l.b16 %v421
        %v470 = vunpack.c.l.b16 %v422
        %v471 = vunpack.c.l.b16 %v423
        %v472 = vunpack.c.l.b16 %v424
        %v473 = vunpack.c.l.b16 %v425
        %v474 = vunpack.c.l.b16 %v426
        %v475 = vpack.c.b16 %v468, %v467
        %v476 = vpack.c.b16 %v470, %v469
        %v477 = vpack.c.b16 %v472, %v471
        %v478 = vpack.c.b16 %v474, %v473
        %v515 = vunpack.c.l.b16 %v427
        %v516 = vunpack.c.h.b16 %v427
        %v517 = vunpack.c.l.b16 %v428
        %v518 = vunpack.c.h.b16 %v428
        %v519 = vunpack.c.l.b16 %v429
        %v520 = vunpack.c.h.b16 %v429
        %v521 = vunpack.c.l.b16 %v430
        %v522 = vunpack.c.h.b16 %v430
        %v523 = vunpack.c.l.b16 %v431
        %v524 = vunpack.c.h.b16 %v431
        %v525 = vunpack.c.l.b16 %v432
        %v526 = vunpack.c.h.b16 %v432
        %v527 = vunpack.c.l.b16 %v433
        %v528 = vunpack.c.h.b16 %v433
        %v529 = vunpack.c.l.b16 %v434
        %v530 = vunpack.c.h.b16 %v434
        %v531 = vunpack.c.l.b16 %v435
        %v532 = vunpack.c.h.b16 %v435
        %v533 = vunpack.c.l.b16 %v436
        %v534 = vunpack.c.h.b16 %v436
        %v535 = vunpack.c.l.b16 %v437
        %v536 = vunpack.c.h.b16 %v437
        %v537 = vunpack.c.l.b16 %v438
        %v538 = vunpack.c.h.b16 %v438
        %v539 = vunpack.c.l.b16 %v439
        %v540 = vunpack.c.h.b16 %v439
        %v541 = vunpack.c.l.b16 %v440
        %v542 = vunpack.c.h.b16 %v440
        %v543 = vunpack.c.l.b16 %v441
        %v544 = vunpack.c.h.b16 %v441
        %v545 = vunpack.c.l.b16 %v442
        %v546 = vunpack.c.h.b16 %v442
        %v547 = vunpack.c.l.b16 %v443
        %v548 = vunpack.c.h.b16 %v443
        %v549 = vunpack.c.l.b16 %v444
        %v550 = vunpack.c.h.b16 %v444
        %v551 = vunpack.c.l.b16 %v445
        %v552 = vunpack.c.h.b16 %v445
        %v553 = vunpack.c.l.b16 %v446
        %v554 = vunpack.c.h.b16 %v446
        %v555 = vunpack.c.l.b16 %v447
        %v556 = vunpack.c.h.b16 %v447
        %v557 = vunpack.c.l.b16 %v448
        %v558 = vunpack.c.h.b16 %v448
        %v559 = vunpack.c.l.b16 %v449
        %v560 = vunpack.c.h.b16 %v449
        %v561 = vunpack.c.l.b16 %v450
        %v562 = vunpack.c.h.b16 %v450
        %v563 = vunpack.c.l.b16 %v451
        %v564 = vunpack.c.h.b16 %v451
        %v565 = vunpack.c.l.b16 %v452
        %v566 = vunpack.c.h.b16 %v452
        %v567 = vunpack.c.l.b16 %v453
        %v568 = vunpack.c.h.b16 %v453
        %v569 = vunpack.c.l.b16 %v454
        %v570 = vunpack.c.h.b16 %v454
        %v571 = vunpack.c.l.b16 %v455
        %v572 = vunpack.c.h.b16 %v455
        %v573 = vunpack.c.l.b16 %v456
        %v574 = vunpack.c.h.b16 %v456
        %v575 = vunpack.c.l.b16 %v457
        %v576 = vunpack.c.h.b16 %v457
        %v577 = vunpack.c.l.b16 %v458
        %v578 = vunpack.c.h.b16 %v458
        %v579 = vpack.c.b16 %v519, %v515
        %v580 = vpack.c.b16 %v520, %v516
        %v581 = vpack.c.b16 %v521, %v517
        %v582 = vpack.c.b16 %v522, %v518
        %v583 = vpack.c.b16 %v527, %v523
        %v584 = vpack.c.b16 %v528, %v524
        %v585 = vpack.c.b16 %v529, %v525
        %v586 = vpack.c.b16 %v530, %v526
        %v587 = vpack.c.b16 %v535, %v531
        %v588 = vpack.c.b16 %v536, %v532
        %v589 = vpack.c.b16 %v537, %v533
        %v590 = vpack.c.b16 %v538, %v534
        %v591 = vpack.c.b16 %v543, %v539
        %v592 = vpack.c.b16 %v544, %v540
        %v593 = vpack.c.b16 %v545, %v541
        %v594 = vpack.c.b16 %v546, %v542
        %v595 = vpack.c.b16 %v551, %v547
        %v596 = vpack.c.b16 %v552, %v548
        %v597 = vpack.c.b16 %v553, %v549
        %v598 = vpack.c.b16 %v554, %v550
        %v599 = vpack.c.b16 %v559, %v555
        %v600 = vpack.c.b16 %v560, %v556
        %v601 = vpack.c.b16 %v561, %v557
        %v602 = vpack.c.b16 %v562, %v558
        %v603 = vpack.c.b16 %v567, %v563
        %v604 = vpack.c.b16 %v568, %v564
        %v605 = vpack.c.b16 %v569, %v565
        %v606 = vpack.c.b16 %v570, %v566
        %v607 = vpack.c.b16 %v575, %v571
        %v608 = vpack.c.b16 %v576, %v572
        %v609 = vpack.c.b16 %v577, %v573
        %v610 = vpack.c.b16 %v578, %v574
        %643 = vmatpush.bf16.msra.mxu0 %v607
        %644 = vmatpush.bf16.msra.mxu0 %v603
        %645 = vmatpush.bf16.msra.mxu0 %v599
        %646 = vmatpush.bf16.msra.mxu0 %v595
        %647 = vmatpush.bf16.msra.mxu0 %v591
        %648 = vmatpush.bf16.msra.mxu0 %v587
        %649 = vmatpush.bf16.msra.mxu0 %v583
        %650 = vmatpush.bf16.msra.mxu0 %v579
        %651 = vmatmul.bf16.gmra.mxu0 %v475
        %v652 = vpop.f32.mrf.mxu0
        %v653 = vadd.f32 0.0, %v652
        %v654 = vpop.f32.mrf.mxu0
        %v655 = vadd.f32 0.0, %v654
        %656 = vmatmul.bf16.gmra.mxu0 %v476
        %v657 = vpop.f32.mrf.mxu0
        %v658 = vadd.f32 0.0, %v657
        %v659 = vpop.f32.mrf.mxu0
        %v660 = vadd.f32 0.0, %v659
        %661 = vmatmul.bf16.gmra.mxu0 %v477
        %v662 = vpop.f32.mrf.mxu0
        %v663 = vadd.f32 0.0, %v662
        %v664 = vpop.f32.mrf.mxu0
        %v665 = vadd.f32 0.0, %v664
        %666 = vmatmul.bf16.gmra.mxu0 %v478
        %v667 = vpop.f32.mrf.mxu0
        %v668 = vadd.f32 0.0, %v667
        %v669 = vpop.f32.mrf.mxu0
        %v670 = vadd.f32 0.0, %v669
        %671 = vdwg.mxu0
        %672 = vmatpush.bf16.msra.mxu0 %v608
        %673 = vmatpush.bf16.msra.mxu0 %v604
        %674 = vmatpush.bf16.msra.mxu0 %v600
        %675 = vmatpush.bf16.msra.mxu0 %v596
        %676 = vmatpush.bf16.msra.mxu0 %v592
        %677 = vmatpush.bf16.msra.mxu0 %v588
        %678 = vmatpush.bf16.msra.mxu0 %v584
        %679 = vmatpush.bf16.msra.mxu0 %v580
        %680 = vmatmul.bf16.gmra.mxu0 %v475
        %v681 = vpop.f32.mrf.mxu0
        %v682 = vadd.f32 0.0, %v681
        %v683 = vpop.f32.mrf.mxu0
        %v684 = vadd.f32 0.0, %v683
        %685 = vmatmul.bf16.gmra.mxu0 %v476
        %v686 = vpop.f32.mrf.mxu0
        %v687 = vadd.f32 0.0, %v686
        %v688 = vpop.f32.mrf.mxu0
        %v689 = vadd.f32 0.0, %v688
        %690 = vmatmul.bf16.gmra.mxu0 %v477
        %v691 = vpop.f32.mrf.mxu0
        %v692 = vadd.f32 0.0, %v691
        %v693 = vpop.f32.mrf.mxu0
        %v694 = vadd.f32 0.0, %v693
        %695 = vmatmul.bf16.gmra.mxu0 %v478
        %v696 = vpop.f32.mrf.mxu0
        %v697 = vadd.f32 0.0, %v696
        %v698 = vpop.f32.mrf.mxu0
        %v699 = vadd.f32 0.0, %v698
        %700 = vdwg.mxu0
        %701 = vmatpush.bf16.msra.mxu0 %v609
        %702 = vmatpush.bf16.msra.mxu0 %v605
        %703 = vmatpush.bf16.msra.mxu0 %v601
        %704 = vmatpush.bf16.msra.mxu0 %v597
        %705 = vmatpush.bf16.msra.mxu0 %v593
        %706 = vmatpush.bf16.msra.mxu0 %v589
        %707 = vmatpush.bf16.msra.mxu0 %v585
        %708 = vmatpush.bf16.msra.mxu0 %v581
        %709 = vmatmul.bf16.gmra.mxu0 %v475
        %v710 = vpop.f32.mrf.mxu0
        %v711 = vadd.f32 0.0, %v710
        %v712 = vpop.f32.mrf.mxu0
        %v713 = vadd.f32 0.0, %v712
        %714 = vmatmul.bf16.gmra.mxu0 %v476
        %v715 = vpop.f32.mrf.mxu0
        %v716 = vadd.f32 0.0, %v715
        %v717 = vpop.f32.mrf.mxu0
        %v718 = vadd.f32 0.0, %v717
        %719 = vmatmul.bf16.gmra.mxu0 %v477
        %v720 = vpop.f32.mrf.mxu0
        %v721 = vadd.f32 0.0, %v720
        %v722 = vpop.f32.mrf.mxu0
        %v723 = vadd.f32 0.0, %v722
        %724 = vmatmul.bf16.gmra.mxu0 %v478
        %v725 = vpop.f32.mrf.mxu0
        %v726 = vadd.f32 0.0, %v725
        %v727 = vpop.f32.mrf.mxu0
        %v728 = vadd.f32 0.0, %v727
        %729 = vdwg.mxu0
        %730 = vmatpush.bf16.msra.mxu0 %v610
        %731 = vmatpush.bf16.msra.mxu0 %v606
        %732 = vmatpush.bf16.msra.mxu0 %v602
        %733 = vmatpush.bf16.msra.mxu0 %v598
        %734 = vmatpush.bf16.msra.mxu0 %v594
        %735 = vmatpush.bf16.msra.mxu0 %v590
        %736 = vmatpush.bf16.msra.mxu0 %v586
        %737 = vmatpush.bf16.msra.mxu0 %v582
        %738 = vmatmul.bf16.gmra.mxu0 %v475
        %v739 = vpop.f32.mrf.mxu0
        %v740 = vadd.f32 0.0, %v739
        %v741 = vpop.f32.mrf.mxu0
        %v742 = vadd.f32 0.0, %v741
        %743 = vmatmul.bf16.gmra.mxu0 %v476
        %v744 = vpop.f32.mrf.mxu0
        %v745 = vadd.f32 0.0, %v744
        %v746 = vpop.f32.mrf.mxu0
        %v747 = vadd.f32 0.0, %v746
        %748 = vmatmul.bf16.gmra.mxu0 %v477
        %v749 = vpop.f32.mrf.mxu0
        %v750 = vadd.f32 0.0, %v749
        %v751 = vpop.f32.mrf.mxu0
        %v752 = vadd.f32 0.0, %v751
        %753 = vmatmul.bf16.gmra.mxu0 %v478
        %v754 = vpop.f32.mrf.mxu0
        %v755 = vadd.f32 0.0, %v754
        %v756 = vpop.f32.mrf.mxu0
        %v757 = vadd.f32 0.0, %v756
        %758 = vdwg.mxu0
        %759 = vst [vmem:[#allocation2] sm:$0xff] %v653
        %760 = vst [vmem:[#allocation2 + $0x8] sm:$0xff] %v682
        %761 = vst [vmem:[#allocation2 + $0x10] sm:$0xff] %v711
        %762 = vst [vmem:[#allocation2 + $0x18] sm:$0xff] %v740
        %763 = vst [vmem:[#allocation2 + $0x20] sm:$0xff] %v655
        %764 = vst [vmem:[#allocation2 + $0x28] sm:$0xff] %v684
        %765 = vst [vmem:[#allocation2 + $0x30] sm:$0xff] %v713
        %766 = vst [vmem:[#allocation2 + $0x38] sm:$0xff] %v742
        %767 = vst [vmem:[#allocation2 + $0x40] sm:$0xff] %v658
        %768 = vst [vmem:[#allocation2 + $0x48] sm:$0xff] %v687
        %769 = vst [vmem:[#allocation2 + $0x50] sm:$0xff] %v716
        %770 = vst [vmem:[#allocation2 + $0x58] sm:$0xff] %v745
        %771 = vst [vmem:[#allocation2 + $0x60] sm:$0xff] %v660
        %772 = vst [vmem:[#allocation2 + $0x68] sm:$0xff] %v689
        %773 = vst [vmem:[#allocation2 + $0x70] sm:$0xff] %v718
        %774 = vst [vmem:[#allocation2 + $0x78] sm:$0xff] %v747
        %775 = vst [vmem:[#allocation2 + $0x80] sm:$0xff] %v663
        %776 = vst [vmem:[#allocation2 + $0x88] sm:$0xff] %v692
        %777 = vst [vmem:[#allocation2 + $0x90] sm:$0xff] %v721
        %778 = vst [vmem:[#allocation2 + $0x98] sm:$0xff] %v750
        %779 = vst [vmem:[#allocation2 + $0xa0] sm:$0xff] %v665
        %780 = vst [vmem:[#allocation2 + $0xa8] sm:$0xff] %v694
        %781 = vst [vmem:[#allocation2 + $0xb0] sm:$0xff] %v723
        %782 = vst [vmem:[#allocation2 + $0xb8] sm:$0xff] %v752
        %783 = vst [vmem:[#allocation2 + $0xc0] sm:$0xff] %v668
        %784 = vst [vmem:[#allocation2 + $0xc8] sm:$0xff] %v697
        %785 = vst [vmem:[#allocation2 + $0xd0] sm:$0xff] %v726
        %786 = vst [vmem:[#allocation2 + $0xd8] sm:$0xff] %v755
        %787 = vst [vmem:[#allocation2 + $0xe0] sm:$0xff] %v670
        %788 = vst [vmem:[#allocation2 + $0xe8] sm:$0xff] %v699
        %789 = vst [vmem:[#allocation2 + $0xf0] sm:$0xff] %v728
        %790 = vst [vmem:[#allocation2 + $0xf8] sm:$0xff] %v757
        %v791 = vld [vmem:[%s409] sm:$0xf]
        %v792 = vld [vmem:[%s1] sm:$0xff]
        %s793 = scalar_select %p410, 1, 0
        %v794 = vstv %s793
        %vm795 = vcmp.eq.s32.totalorder %v794, 1
        %v796 = vsel %vm795, %v792, 0
        %s797 = smul.u32 %s35, 8
        %v798 = vld [vmem:[#allocation3] sm:$0xff]
        %v799 = vld [vmem:[#allocation4] sm:$0xff]
        %v800 = vld [vmem:[%s393] sm:$0xff]
        %v801 = vld [vmem:[%s400] sm:$0xff]
        %s802 = ssub.s32 7, %s797
        %s803 = scalar_select %p410, %s802, %s797
        %s804 = scalar_select %p410, 7, 0
        %s805 = smul.u32 %s804, 8
        %s806 = sshra.s32 %s805, 3
        %s807 = sand.u32 %s805, 7
        %s808 = smul.u32 %s806, 4
        %s809 = smul.addr %s808, 8
        %s810 = scalar_lea.vmem [#allocation2], %s809
        %v811 = vld [vmem:[%s810] sm:$0xff]
        %v812 = vld [vmem:[%s810 + $0x8] sm:$0xff]
        %v813 = vld [vmem:[%s810 + $0x10] sm:$0xff]
        %v814 = vld [vmem:[%s810 + $0x18] sm:$0xff]
        %v815 = vpack.c.bf16 %v798, %v798
        %v816 = vld [vmem:[%s352] sm:$0xff]
        %v817 = vld [vmem:[%s352 + $0x8] sm:$0xff]
        %v818 = vld [vmem:[%s352 + $0x10] sm:$0xff]
        %v819 = vld [vmem:[%s352 + $0x18] sm:$0xff]
        %v820 = vld [vmem:[%s352 + $0x20] sm:$0xff]
        %v821 = vld [vmem:[%s352 + $0x28] sm:$0xff]
        %v822 = vld [vmem:[%s352 + $0x30] sm:$0xff]
        %v823 = vld [vmem:[%s352 + $0x38] sm:$0xff]
        %v824 = vld [vmem:[%s352 + $0x40] sm:$0xff]
        %v825 = vld [vmem:[%s352 + $0x48] sm:$0xff]
        %v826 = vld [vmem:[%s352 + $0x50] sm:$0xff]
        %v827 = vld [vmem:[%s352 + $0x58] sm:$0xff]
        %v828 = vld [vmem:[%s352 + $0x60] sm:$0xff]
        %v829 = vld [vmem:[%s352 + $0x68] sm:$0xff]
        %v830 = vld [vmem:[%s352 + $0x70] sm:$0xff]
        %v831 = vld [vmem:[%s352 + $0x78] sm:$0xff]
        %v832 = vld [vmem:[%s352 + $0x80] sm:$0xff]
        %v833 = vld [vmem:[%s352 + $0x88] sm:$0xff]
        %v834 = vld [vmem:[%s352 + $0x90] sm:$0xff]
        %v835 = vld [vmem:[%s352 + $0x98] sm:$0xff]
        %v836 = vld [vmem:[%s352 + $0xa0] sm:$0xff]
        %v837 = vld [vmem:[%s352 + $0xa8] sm:$0xff]
        %v838 = vld [vmem:[%s352 + $0xb0] sm:$0xff]
        %v839 = vld [vmem:[%s352 + $0xb8] sm:$0xff]
        %v840 = vld [vmem:[%s352 + $0xc0] sm:$0xff]
        %v841 = vld [vmem:[%s352 + $0xc8] sm:$0xff]
        %v842 = vld [vmem:[%s352 + $0xd0] sm:$0xff]
        %v843 = vld [vmem:[%s352 + $0xd8] sm:$0xff]
        %v844 = vld [vmem:[%s352 + $0xe0] sm:$0xff]
        %v845 = vld [vmem:[%s352 + $0xe8] sm:$0xff]
        %v846 = vld [vmem:[%s352 + $0xf0] sm:$0xff]
        %v847 = vld [vmem:[%s352 + $0xf8] sm:$0xff]
        %v880 = vunpack.c.l.b16 %v816
        %v881 = vunpack.c.h.b16 %v816
        %v882 = vunpack.c.l.b16 %v817
        %v883 = vunpack.c.h.b16 %v817
        %v884 = vunpack.c.l.b16 %v818
        %v885 = vunpack.c.h.b16 %v818
        %v886 = vunpack.c.l.b16 %v819
        %v887 = vunpack.c.h.b16 %v819
        %v888 = vunpack.c.l.b16 %v820
        %v889 = vunpack.c.h.b16 %v820
        %v890 = vunpack.c.l.b16 %v821
        %v891 = vunpack.c.h.b16 %v821
        %v892 = vunpack.c.l.b16 %v822
        %v893 = vunpack.c.h.b16 %v822
        %v894 = vunpack.c.l.b16 %v823
        %v895 = vunpack.c.h.b16 %v823
        %v896 = vunpack.c.l.b16 %v824
        %v897 = vunpack.c.h.b16 %v824
        %v898 = vunpack.c.l.b16 %v825
        %v899 = vunpack.c.h.b16 %v825
        %v900 = vunpack.c.l.b16 %v826
        %v901 = vunpack.c.h.b16 %v826
        %v902 = vunpack.c.l.b16 %v827
        %v903 = vunpack.c.h.b16 %v827
        %v904 = vunpack.c.l.b16 %v828
        %v905 = vunpack.c.h.b16 %v828
        %v906 = vunpack.c.l.b16 %v829
        %v907 = vunpack.c.h.b16 %v829
        %v908 = vunpack.c.l.b16 %v830
        %v909 = vunpack.c.h.b16 %v830
        %v910 = vunpack.c.l.b16 %v831
        %v911 = vunpack.c.h.b16 %v831
        %v912 = vunpack.c.l.b16 %v832
        %v913 = vunpack.c.h.b16 %v832
        %v914 = vunpack.c.l.b16 %v833
        %v915 = vunpack.c.h.b16 %v833
        %v916 = vunpack.c.l.b16 %v834
        %v917 = vunpack.c.h.b16 %v834
        %v918 = vunpack.c.l.b16 %v835
        %v919 = vunpack.c.h.b16 %v835
        %v920 = vunpack.c.l.b16 %v836
        %v921 = vunpack.c.h.b16 %v836
        %v922 = vunpack.c.l.b16 %v837
        %v923 = vunpack.c.h.b16 %v837
        %v924 = vunpack.c.l.b16 %v838
        %v925 = vunpack.c.h.b16 %v838
        %v926 = vunpack.c.l.b16 %v839
        %v927 = vunpack.c.h.b16 %v839
        %v928 = vunpack.c.l.b16 %v840
        %v929 = vunpack.c.h.b16 %v840
        %v930 = vunpack.c.l.b16 %v841
        %v931 = vunpack.c.h.b16 %v841
        %v932 = vunpack.c.l.b16 %v842
        %v933 = vunpack.c.h.b16 %v842
        %v934 = vunpack.c.l.b16 %v843
        %v935 = vunpack.c.h.b16 %v843
        %v936 = vunpack.c.l.b16 %v844
        %v937 = vunpack.c.h.b16 %v844
        %v938 = vunpack.c.l.b16 %v845
        %v939 = vunpack.c.h.b16 %v845
        %v940 = vunpack.c.l.b16 %v846
        %v941 = vunpack.c.h.b16 %v846
        %v942 = vunpack.c.l.b16 %v847
        %v943 = vunpack.c.h.b16 %v847
        %v944 = vpack.c.b16 %v884, %v880
        %v945 = vpack.c.b16 %v885, %v881
        %v946 = vpack.c.b16 %v886, %v882
        %v947 = vpack.c.b16 %v887, %v883
        %v948 = vpack.c.b16 %v892, %v888
        %v949 = vpack.c.b16 %v893, %v889
        %v950 = vpack.c.b16 %v894, %v890
        %v951 = vpack.c.b16 %v895, %v891
        %v952 = vpack.c.b16 %v900, %v896
        %v953 = vpack.c.b16 %v901, %v897
        %v954 = vpack.c.b16 %v902, %v898
        %v955 = vpack.c.b16 %v903, %v899
        %v956 = vpack.c.b16 %v908, %v904
        %v957 = vpack.c.b16 %v909, %v905
        %v958 = vpack.c.b16 %v910, %v906
        %v959 = vpack.c.b16 %v911, %v907
        %v960 = vpack.c.b16 %v916, %v912
        %v961 = vpack.c.b16 %v917, %v913
        %v962 = vpack.c.b16 %v918, %v914
        %v963 = vpack.c.b16 %v919, %v915
        %v964 = vpack.c.b16 %v924, %v920
        %v965 = vpack.c.b16 %v925, %v921
        %v966 = vpack.c.b16 %v926, %v922
        %v967 = vpack.c.b16 %v927, %v923
        %v968 = vpack.c.b16 %v932, %v928
        %v969 = vpack.c.b16 %v933, %v929
        %v970 = vpack.c.b16 %v934, %v930
        %v971 = vpack.c.b16 %v935, %v931
        %v972 = vpack.c.b16 %v940, %v936
        %v973 = vpack.c.b16 %v941, %v937
        %v974 = vpack.c.b16 %v942, %v938
        %v975 = vpack.c.b16 %v943, %v939
        %1008 = vmatpush.bf16.msra.mxu0 %v972
        %1009 = vmatpush.bf16.msra.mxu0 %v968
        %1010 = vmatpush.bf16.msra.mxu0 %v964
        %1011 = vmatpush.bf16.msra.mxu0 %v960
        %1012 = vmatpush.bf16.msra.mxu0 %v956
        %1013 = vmatpush.bf16.msra.mxu0 %v952
        %1014 = vmatpush.bf16.msra.mxu0 %v948
        %1015 = vmatpush.bf16.msra.mxu0 %v944
        %1016 = vmatmul.bf16.gmra.mxu0 %v815
        %v1017 = vpop.f32.mrf.mxu0
        %v1018 = vadd.f32 0.0, %v1017
        %v1019 = vpop.f32.mrf.mxu0
        %1020 = vdwg.mxu0
        %1021 = vmatpush.bf16.msra.mxu0 %v973
        %1022 = vmatpush.bf16.msra.mxu0 %v969
        %1023 = vmatpush.bf16.msra.mxu0 %v965
        %1024 = vmatpush.bf16.msra.mxu0 %v961
        %1025 = vmatpush.bf16.msra.mxu0 %v957
        %1026 = vmatpush.bf16.msra.mxu0 %v953
        %1027 = vmatpush.bf16.msra.mxu0 %v949
        %1028 = vmatpush.bf16.msra.mxu0 %v945
        %1029 = vmatmul.bf16.gmra.mxu0 %v815
        %v1030 = vpop.f32.mrf.mxu0
        %v1031 = vadd.f32 0.0, %v1030
        %v1032 = vpop.f32.mrf.mxu0
        %1033 = vdwg.mxu0
        %1034 = vmatpush.bf16.msra.mxu0 %v974
        %1035 = vmatpush.bf16.msra.mxu0 %v970
        %1036 = vmatpush.bf16.msra.mxu0 %v966
        %1037 = vmatpush.bf16.msra.mxu0 %v962
        %1038 = vmatpush.bf16.msra.mxu0 %v958
        %1039 = vmatpush.bf16.msra.mxu0 %v954
        %1040 = vmatpush.bf16.msra.mxu0 %v950
        %1041 = vmatpush.bf16.msra.mxu0 %v946
        %1042 = vmatmul.bf16.gmra.mxu0 %v815
        %v1043 = vpop.f32.mrf.mxu0
        %v1044 = vadd.f32 0.0, %v1043
        %v1045 = vpop.f32.mrf.mxu0
        %1046 = vdwg.mxu0
        %1047 = vmatpush.bf16.msra.mxu0 %v975
        %1048 = vmatpush.bf16.msra.mxu0 %v971
        %1049 = vmatpush.bf16.msra.mxu0 %v967
        %1050 = vmatpush.bf16.msra.mxu0 %v963
        %1051 = vmatpush.bf16.msra.mxu0 %v959
        %1052 = vmatpush.bf16.msra.mxu0 %v955
        %1053 = vmatpush.bf16.msra.mxu0 %v951
        %1054 = vmatpush.bf16.msra.mxu0 %v947
        %1055 = vmatmul.bf16.gmra.mxu0 %v815
        %v1056 = vpop.f32.mrf.mxu0
        %v1057 = vadd.f32 0.0, %v1056
        %v1058 = vpop.f32.mrf.mxu0
        %1059 = vdwg.mxu0
        %v1060 = vadd.f32 %v811, %v1018
        %v1061 = vadd.f32 %v812, %v1031
        %v1062 = vadd.f32 %v813, %v1044
        %v1063 = vadd.f32 %v814, %v1057
        %v1065 = vperm.slane %v791, 0
        %v1066 = vperm.slane %v791, 1
        %v1067 = vperm.slane %v791, 2
        %v1068 = vperm.slane %v791, 3
        %v1073 = vadd.f32 %v1060, %v1065
        %v1074 = vadd.f32 %v1061, %v1066
        %v1075 = vadd.f32 %v1062, %v1067
        %v1076 = vadd.f32 %v1063, %v1068
        %v1077 = vxor.u32 %v1073, 2147483648
        %v1078 = vmul.f32 %v1077, 1.442695
        %v1079 = vpow.pop %v1078
        %v1080 = vadd.f32 %v1079, 1.0
        %v1081 = vrcp.pop %v1080
        %v1082 = vmul.f32 %v1080, %v1081
        %v1083 = vsub.f32 1.0, %v1082
        %v1084 = vmul.f32 %v1081, %v1083
        %v1085 = vadd.f32 %v1081, %v1084
        %vm1086 = vweird.f32 %v1080
        %vm1087 = vweird.f32 %v1081
        %vm1088 = vmor %vm1086, %vm1087
        %v1089 = vsel %vm1088, %v1081, %v1085
        %v1090 = vand.u32 2147483647, %v1080
        %vm1091 = vcmp.eq.f32.partialorder %v1090, 8.507059e+37
        %v1092 = vand.u32 %v1080, 2147483648
        %v1093 = vor.u32 1.1754944e-38, %v1092
        %v1094 = vsel %vm1091, %v1093, %v1089
        %v1095 = vmul.f32 1.0, %v1094
        %v1096 = vxor.u32 %v1074, 2147483648
        %v1097 = vmul.f32 %v1096, 1.442695
        %v1098 = vpow.pop %v1097
        %v1099 = vadd.f32 %v1098, 1.0
        %v1100 = vrcp.pop %v1099
        %v1101 = vmul.f32 %v1099, %v1100
        %v1102 = vsub.f32 1.0, %v1101
        %v1103 = vmul.f32 %v1100, %v1102
        %v1104 = vadd.f32 %v1100, %v1103
        %vm1105 = vweird.f32 %v1099
        %vm1106 = vweird.f32 %v1100
        %vm1107 = vmor %vm1105, %vm1106
        %v1108 = vsel %vm1107, %v1100, %v1104
        %v1109 = vand.u32 2147483647, %v1099
        %vm1110 = vcmp.eq.f32.partialorder %v1109, 8.507059e+37
        %v1111 = vand.u32 %v1099, 2147483648
        %v1112 = vor.u32 1.1754944e-38, %v1111
        %v1113 = vsel %vm1110, %v1112, %v1108
        %v1114 = vmul.f32 1.0, %v1113
        %v1115 = vtanh.pop %v1075
        %v1116 = vxor.u32 %v1076, 2147483648
        %v1117 = vmul.f32 %v1116, 1.442695
        %v1118 = vpow.pop %v1117
        %v1119 = vadd.f32 %v1118, 1.0
        %v1120 = vrcp.pop %v1119
        %v1121 = vmul.f32 %v1119, %v1120
        %v1122 = vsub.f32 1.0, %v1121
        %v1123 = vmul.f32 %v1120, %v1122
        %v1124 = vadd.f32 %v1120, %v1123
        %vm1125 = vweird.f32 %v1119
        %vm1126 = vweird.f32 %v1120
        %vm1127 = vmor %vm1125, %vm1126
        %v1128 = vsel %vm1127, %v1120, %v1124
        %v1129 = vand.u32 2147483647, %v1119
        %vm1130 = vcmp.eq.f32.partialorder %v1129, 8.507059e+37
        %v1131 = vand.u32 %v1119, 2147483648
        %v1132 = vor.u32 1.1754944e-38, %v1131
        %v1133 = vsel %vm1130, %v1132, %v1128
        %v1134 = vmul.f32 1.0, %v1133
        %v1135 = vmul.f32 %v1114, %v799
        %v1136 = vmul.f32 %v1095, %v1115
        %v1137 = vadd.f32 %v1135, %v1136
        %v1138 = vtanh.pop %v1137
        %v1139 = vmul.f32 %v1134, %v1138
        %p1140 = scmp.lt.s32.totalorder %s803, 8
        %s1141 = scalar_select %p1140, 1, 0
        %v1142 = vstv %s1141
        %vm1143 = vcmp.eq.s32.totalorder %v1142, 1
        %v1144 = vsel %vm1143, %v1139, %v798
        %v1145 = vsel %vm1143, %v1137, %v799
        %v1146 = vmax.f32 %v800, %v1139
        %v1147 = vsel %vm1143, %v1146, %v800
        %v1148 = vstv %s803
        %vm1149 = vcmp.eq.s32.totalorder %v796, %v1148
        %v1150 = vsel %vm1149, 1, 0
        %1151 = vset.pattern.permute.xlu0 0
        %1152 = vperm.xlu0 %1151, %v1150
        %v1153 = vpop.permute.xlu0 %1152
        %vm1154 = vcmp.eq.s32.totalorder %v1153, 1
        %v1155 = vsel %vm1154, %v1139, %v801
        %s1156 = sadd.s32 %s797, 1
        %s1157 = ssub.s32 6, %s797
        %s1158 = scalar_select %p410, %s1157, %s1156
        %s1159 = scalar_select %p410, 6, 1
        %s1160 = smul.u32 %s1159, 8
        %s1161 = sshra.s32 %s1160, 3
        %s1162 = sand.u32 %s1160, 7
        %s1163 = smul.u32 %s1161, 4
        %s1164 = smul.addr %s1163, 8
        %s1165 = scalar_lea.vmem [#allocation2], %s1164
        %v1166 = vld [vmem:[%s1165] sm:$0xff]
        %v1167 = vld [vmem:[%s1165 + $0x8] sm:$0xff]
        %v1168 = vld [vmem:[%s1165 + $0x10] sm:$0xff]
        %v1169 = vld [vmem:[%s1165 + $0x18] sm:$0xff]
        %v1170 = vpack.c.bf16 %v1144, %v1144
        %1171 = vmatpush.bf16.msra.mxu0 %v972
        %1172 = vmatpush.bf16.msra.mxu0 %v968
        %1173 = vmatpush.bf16.msra.mxu0 %v964
        %1174 = vmatpush.bf16.msra.mxu0 %v960
        %1175 = vmatpush.bf16.msra.mxu0 %v956
        %1176 = vmatpush.bf16.msra.mxu0 %v952
        %1177 = vmatpush.bf16.msra.mxu0 %v948
        %1178 = vmatpush.bf16.msra.mxu0 %v944
        %1179 = vmatmul.bf16.gmra.mxu0 %v1170
        %v1180 = vpop.f32.mrf.mxu0
        %v1181 = vadd.f32 0.0, %v1180
        %v1182 = vpop.f32.mrf.mxu0
        %1183 = vdwg.mxu0
        %1184 = vmatpush.bf16.msra.mxu0 %v973
        %1185 = vmatpush.bf16.msra.mxu0 %v969
        %1186 = vmatpush.bf16.msra.mxu0 %v965
        %1187 = vmatpush.bf16.msra.mxu0 %v961
        %1188 = vmatpush.bf16.msra.mxu0 %v957
        %1189 = vmatpush.bf16.msra.mxu0 %v953
        %1190 = vmatpush.bf16.msra.mxu0 %v949
        %1191 = vmatpush.bf16.msra.mxu0 %v945
        %1192 = vmatmul.bf16.gmra.mxu0 %v1170
        %v1193 = vpop.f32.mrf.mxu0
        %v1194 = vadd.f32 0.0, %v1193
        %v1195 = vpop.f32.mrf.mxu0
        %1196 = vdwg.mxu0
        %1197 = vmatpush.bf16.msra.mxu0 %v974
        %1198 = vmatpush.bf16.msra.mxu0 %v970
        %1199 = vmatpush.bf16.msra.mxu0 %v966
        %1200 = vmatpush.bf16.msra.mxu0 %v962
        %1201 = vmatpush.bf16.msra.mxu0 %v958
        %1202 = vmatpush.bf16.msra.mxu0 %v954
        %1203 = vmatpush.bf16.msra.mxu0 %v950
        %1204 = vmatpush.bf16.msra.mxu0 %v946
        %1205 = vmatmul.bf16.gmra.mxu0 %v1170
        %v1206 = vpop.f32.mrf.mxu0
        %v1207 = vadd.f32 0.0, %v1206
        %v1208 = vpop.f32.mrf.mxu0
        %1209 = vdwg.mxu0
        %1210 = vmatpush.bf16.msra.mxu0 %v975
        %1211 = vmatpush.bf16.msra.mxu0 %v971
        %1212 = vmatpush.bf16.msra.mxu0 %v967
        %1213 = vmatpush.bf16.msra.mxu0 %v963
        %1214 = vmatpush.bf16.msra.mxu0 %v959
        %1215 = vmatpush.bf16.msra.mxu0 %v955
        %1216 = vmatpush.bf16.msra.mxu0 %v951
        %1217 = vmatpush.bf16.msra.mxu0 %v947
        %1218 = vmatmul.bf16.gmra.mxu0 %v1170
        %v1219 = vpop.f32.mrf.mxu0
        %v1220 = vadd.f32 0.0, %v1219
        %v1221 = vpop.f32.mrf.mxu0
        %1222 = vdwg.mxu0
        %v1223 = vadd.f32 %v1166, %v1181
        %v1224 = vadd.f32 %v1167, %v1194
        %v1225 = vadd.f32 %v1168, %v1207
        %v1226 = vadd.f32 %v1169, %v1220
        %v1227 = vadd.f32 %v1223, %v1065
        %v1228 = vadd.f32 %v1224, %v1066
        %v1229 = vadd.f32 %v1225, %v1067
        %v1230 = vadd.f32 %v1226, %v1068
        %v1231 = vxor.u32 %v1227, 2147483648
        %v1232 = vmul.f32 %v1231, 1.442695
        %v1233 = vpow.pop %v1232
        %v1234 = vadd.f32 %v1233, 1.0
        %v1235 = vrcp.pop %v1234
        %v1236 = vmul.f32 %v1234, %v1235
        %v1237 = vsub.f32 1.0, %v1236
        %v1238 = vmul.f32 %v1235, %v1237
        %v1239 = vadd.f32 %v1235, %v1238
        %vm1240 = vweird.f32 %v1234
        %vm1241 = vweird.f32 %v1235
        %vm1242 = vmor %vm1240, %vm1241
        %v1243 = vsel %vm1242, %v1235, %v1239
        %v1244 = vand.u32 2147483647, %v1234
        %vm1245 = vcmp.eq.f32.partialorder %v1244, 8.507059e+37
        %v1246 = vand.u32 %v1234, 2147483648
        %v1247 = vor.u32 1.1754944e-38, %v1246
        %v1248 = vsel %vm1245, %v1247, %v1243
        %v1249 = vmul.f32 1.0, %v1248
        %v1250 = vxor.u32 %v1228, 2147483648
        %v1251 = vmul.f32 %v1250, 1.442695
        %v1252 = vpow.pop %v1251
        %v1253 = vadd.f32 %v1252, 1.0
        %v1254 = vrcp.pop %v1253
        %v1255 = vmul.f32 %v1253, %v1254
        %v1256 = vsub.f32 1.0, %v1255
        %v1257 = vmul.f32 %v1254, %v1256
        %v1258 = vadd.f32 %v1254, %v1257
        %vm1259 = vweird.f32 %v1253
        %vm1260 = vweird.f32 %v1254
        %vm1261 = vmor %vm1259, %vm1260
        %v1262 = vsel %vm1261, %v1254, %v1258
        %v1263 = vand.u32 2147483647, %v1253
        %vm1264 = vcmp.eq.f32.partialorder %v1263, 8.507059e+37
        %v1265 = vand.u32 %v1253, 2147483648
        %v1266 = vor.u32 1.1754944e-38, %v1265
        %v1267 = vsel %vm1264, %v1266, %v1262
        %v1268 = vmul.f32 1.0, %v1267
        %v1269 = vtanh.pop %v1229
        %v1270 = vxor.u32 %v1230, 2147483648
        %v1271 = vmul.f32 %v1270, 1.442695
        %v1272 = vpow.pop %v1271
        %v1273 = vadd.f32 %v1272, 1.0
        %v1274 = vrcp.pop %v1273
        %v1275 = vmul.f32 %v1273, %v1274
        %v1276 = vsub.f32 1.0, %v1275
        %v1277 = vmul.f32 %v1274, %v1276
        %v1278 = vadd.f32 %v1274, %v1277
        %vm1279 = vweird.f32 %v1273
        %vm1280 = vweird.f32 %v1274
        %vm1281 = vmor %vm1279, %vm1280
        %v1282 = vsel %vm1281, %v1274, %v1278
        %v1283 = vand.u32 2147483647, %v1273
        %vm1284 = vcmp.eq.f32.partialorder %v1283, 8.507059e+37
        %v1285 = vand.u32 %v1273, 2147483648
        %v1286 = vor.u32 1.1754944e-38, %v1285
        %v1287 = vsel %vm1284, %v1286, %v1282
        %v1288 = vmul.f32 1.0, %v1287
        %v1289 = vmul.f32 %v1268, %v1145
        %v1290 = vmul.f32 %v1249, %v1269
        %v1291 = vadd.f32 %v1289, %v1290
        %v1292 = vtanh.pop %v1291
        %v1293 = vmul.f32 %v1288, %v1292
        %p1294 = scmp.lt.s32.totalorder %s1158, 8
        %s1295 = scalar_select %p1294, 1, 0
        %v1296 = vstv %s1295
        %vm1297 = vcmp.eq.s32.totalorder %v1296, 1
        %v1298 = vsel %vm1297, %v1293, %v1144
        %v1299 = vsel %vm1297, %v1291, %v1145
        %v1300 = vmax.f32 %v1147, %v1293
        %v1301 = vsel %vm1297, %v1300, %v1147
        %v1302 = vstv %s1158
        %vm1303 = vcmp.eq.s32.totalorder %v796, %v1302
        %v1304 = vsel %vm1303, 1, 0
        %1305 = vset.pattern.permute.xlu0 0
        %1306 = vperm.xlu0 %1305, %v1304
        %v1307 = vpop.permute.xlu0 %1306
        %vm1308 = vcmp.eq.s32.totalorder %v1307, 1
        %v1309 = vsel %vm1308, %v1293, %v1155
        %s1310 = sadd.s32 %s797, 2
        %s1311 = ssub.s32 5, %s797
        %s1312 = scalar_select %p410, %s1311, %s1310
        %s1313 = scalar_select %p410, 5, 2
        %s1314 = smul.u32 %s1313, 8
        %s1315 = sshra.s32 %s1314, 3
        %s1316 = sand.u32 %s1314, 7
        %s1317 = smul.u32 %s1315, 4
        %s1318 = smul.addr %s1317, 8
        %s1319 = scalar_lea.vmem [#allocation2], %s1318
        %v1320 = vld [vmem:[%s1319] sm:$0xff]
        %v1321 = vld [vmem:[%s1319 + $0x8] sm:$0xff]
        %v1322 = vld [vmem:[%s1319 + $0x10] sm:$0xff]
        %v1323 = vld [vmem:[%s1319 + $0x18] sm:$0xff]
        %v1324 = vpack.c.bf16 %v1298, %v1298
        %1325 = vmatpush.bf16.msra.mxu0 %v972
        %1326 = vmatpush.bf16.msra.mxu0 %v968
        %1327 = vmatpush.bf16.msra.mxu0 %v964
        %1328 = vmatpush.bf16.msra.mxu0 %v960
        %1329 = vmatpush.bf16.msra.mxu0 %v956
        %1330 = vmatpush.bf16.msra.mxu0 %v952
        %1331 = vmatpush.bf16.msra.mxu0 %v948
        %1332 = vmatpush.bf16.msra.mxu0 %v944
        %1333 = vmatmul.bf16.gmra.mxu0 %v1324
        %v1334 = vpop.f32.mrf.mxu0
        %v1335 = vadd.f32 0.0, %v1334
        %v1336 = vpop.f32.mrf.mxu0
        %1337 = vdwg.mxu0
        %1338 = vmatpush.bf16.msra.mxu0 %v973
        %1339 = vmatpush.bf16.msra.mxu0 %v969
        %1340 = vmatpush.bf16.msra.mxu0 %v965
        %1341 = vmatpush.bf16.msra.mxu0 %v961
        %1342 = vmatpush.bf16.msra.mxu0 %v957
        %1343 = vmatpush.bf16.msra.mxu0 %v953
        %1344 = vmatpush.bf16.msra.mxu0 %v949
        %1345 = vmatpush.bf16.msra.mxu0 %v945
        %1346 = vmatmul.bf16.gmra.mxu0 %v1324
        %v1347 = vpop.f32.mrf.mxu0
        %v1348 = vadd.f32 0.0, %v1347
        %v1349 = vpop.f32.mrf.mxu0
        %1350 = vdwg.mxu0
        %1351 = vmatpush.bf16.msra.mxu0 %v974
        %1352 = vmatpush.bf16.msra.mxu0 %v970
        %1353 = vmatpush.bf16.msra.mxu0 %v966
        %1354 = vmatpush.bf16.msra.mxu0 %v962
        %1355 = vmatpush.bf16.msra.mxu0 %v958
        %1356 = vmatpush.bf16.msra.mxu0 %v954
        %1357 = vmatpush.bf16.msra.mxu0 %v950
        %1358 = vmatpush.bf16.msra.mxu0 %v946
        %1359 = vmatmul.bf16.gmra.mxu0 %v1324
        %v1360 = vpop.f32.mrf.mxu0
        %v1361 = vadd.f32 0.0, %v1360
        %v1362 = vpop.f32.mrf.mxu0
        %1363 = vdwg.mxu0
        %1364 = vmatpush.bf16.msra.mxu0 %v975
        %1365 = vmatpush.bf16.msra.mxu0 %v971
        %1366 = vmatpush.bf16.msra.mxu0 %v967
        %1367 = vmatpush.bf16.msra.mxu0 %v963
        %1368 = vmatpush.bf16.msra.mxu0 %v959
        %1369 = vmatpush.bf16.msra.mxu0 %v955
        %1370 = vmatpush.bf16.msra.mxu0 %v951
        %1371 = vmatpush.bf16.msra.mxu0 %v947
        %1372 = vmatmul.bf16.gmra.mxu0 %v1324
        %v1373 = vpop.f32.mrf.mxu0
        %v1374 = vadd.f32 0.0, %v1373
        %v1375 = vpop.f32.mrf.mxu0
        %1376 = vdwg.mxu0
        %v1377 = vadd.f32 %v1320, %v1335
        %v1378 = vadd.f32 %v1321, %v1348
        %v1379 = vadd.f32 %v1322, %v1361
        %v1380 = vadd.f32 %v1323, %v1374
        %v1381 = vadd.f32 %v1377, %v1065
        %v1382 = vadd.f32 %v1378, %v1066
        %v1383 = vadd.f32 %v1379, %v1067
        %v1384 = vadd.f32 %v1380, %v1068
        %v1385 = vxor.u32 %v1381, 2147483648
        %v1386 = vmul.f32 %v1385, 1.442695
        %v1387 = vpow.pop %v1386
        %v1388 = vadd.f32 %v1387, 1.0
        %v1389 = vrcp.pop %v1388
        %v1390 = vmul.f32 %v1388, %v1389
        %v1391 = vsub.f32 1.0, %v1390
        %v1392 = vmul.f32 %v1389, %v1391
        %v1393 = vadd.f32 %v1389, %v1392
        %vm1394 = vweird.f32 %v1388
        %vm1395 = vweird.f32 %v1389
        %vm1396 = vmor %vm1394, %vm1395
        %v1397 = vsel %vm1396, %v1389, %v1393
        %v1398 = vand.u32 2147483647, %v1388
        %vm1399 = vcmp.eq.f32.partialorder %v1398, 8.507059e+37
        %v1400 = vand.u32 %v1388, 2147483648
        %v1401 = vor.u32 1.1754944e-38, %v1400
        %v1402 = vsel %vm1399, %v1401, %v1397
        %v1403 = vmul.f32 1.0, %v1402
        %v1404 = vxor.u32 %v1382, 2147483648
        %v1405 = vmul.f32 %v1404, 1.442695
        %v1406 = vpow.pop %v1405
        %v1407 = vadd.f32 %v1406, 1.0
        %v1408 = vrcp.pop %v1407
        %v1409 = vmul.f32 %v1407, %v1408
        %v1410 = vsub.f32 1.0, %v1409
        %v1411 = vmul.f32 %v1408, %v1410
        %v1412 = vadd.f32 %v1408, %v1411
        %vm1413 = vweird.f32 %v1407
        %vm1414 = vweird.f32 %v1408
        %vm1415 = vmor %vm1413, %vm1414
        %v1416 = vsel %vm1415, %v1408, %v1412
        %v1417 = vand.u32 2147483647, %v1407
        %vm1418 = vcmp.eq.f32.partialorder %v1417, 8.507059e+37
        %v1419 = vand.u32 %v1407, 2147483648
        %v1420 = vor.u32 1.1754944e-38, %v1419
        %v1421 = vsel %vm1418, %v1420, %v1416
        %v1422 = vmul.f32 1.0, %v1421
        %v1423 = vtanh.pop %v1383
        %v1424 = vxor.u32 %v1384, 2147483648
        %v1425 = vmul.f32 %v1424, 1.442695
        %v1426 = vpow.pop %v1425
        %v1427 = vadd.f32 %v1426, 1.0
        %v1428 = vrcp.pop %v1427
        %v1429 = vmul.f32 %v1427, %v1428
        %v1430 = vsub.f32 1.0, %v1429
        %v1431 = vmul.f32 %v1428, %v1430
        %v1432 = vadd.f32 %v1428, %v1431
        %vm1433 = vweird.f32 %v1427
        %vm1434 = vweird.f32 %v1428
        %vm1435 = vmor %vm1433, %vm1434
        %v1436 = vsel %vm1435, %v1428, %v1432
        %v1437 = vand.u32 2147483647, %v1427
        %vm1438 = vcmp.eq.f32.partialorder %v1437, 8.507059e+37
        %v1439 = vand.u32 %v1427, 2147483648
        %v1440 = vor.u32 1.1754944e-38, %v1439
        %v1441 = vsel %vm1438, %v1440, %v1436
        %v1442 = vmul.f32 1.0, %v1441
        %v1443 = vmul.f32 %v1422, %v1299
        %v1444 = vmul.f32 %v1403, %v1423
        %v1445 = vadd.f32 %v1443, %v1444
        %v1446 = vtanh.pop %v1445
        %v1447 = vmul.f32 %v1442, %v1446
        %p1448 = scmp.lt.s32.totalorder %s1312, 8
        %s1449 = scalar_select %p1448, 1, 0
        %v1450 = vstv %s1449
        %vm1451 = vcmp.eq.s32.totalorder %v1450, 1
        %v1452 = vsel %vm1451, %v1447, %v1298
        %v1453 = vsel %vm1451, %v1445, %v1299
        %v1454 = vmax.f32 %v1301, %v1447
        %v1455 = vsel %vm1451, %v1454, %v1301
        %v1456 = vstv %s1312
        %vm1457 = vcmp.eq.s32.totalorder %v796, %v1456
        %v1458 = vsel %vm1457, 1, 0
        %1459 = vset.pattern.permute.xlu0 0
        %1460 = vperm.xlu0 %1459, %v1458
        %v1461 = vpop.permute.xlu0 %1460
        %vm1462 = vcmp.eq.s32.totalorder %v1461, 1
        %v1463 = vsel %vm1462, %v1447, %v1309
        %s1464 = sadd.s32 %s797, 3
        %s1465 = ssub.s32 4, %s797
        %s1466 = scalar_select %p410, %s1465, %s1464
        %s1467 = scalar_select %p410, 4, 3
        %s1468 = smul.u32 %s1467, 8
        %s1469 = sshra.s32 %s1468, 3
        %s1470 = sand.u32 %s1468, 7
        %s1471 = smul.u32 %s1469, 4
        %s1472 = smul.addr %s1471, 8
        %s1473 = scalar_lea.vmem [#allocation2], %s1472
        %v1474 = vld [vmem:[%s1473] sm:$0xff]
        %v1475 = vld [vmem:[%s1473 + $0x8] sm:$0xff]
        %v1476 = vld [vmem:[%s1473 + $0x10] sm:$0xff]
        %v1477 = vld [vmem:[%s1473 + $0x18] sm:$0xff]
        %v1478 = vpack.c.bf16 %v1452, %v1452
        %1479 = vmatpush.bf16.msra.mxu0 %v972
        %1480 = vmatpush.bf16.msra.mxu0 %v968
        %1481 = vmatpush.bf16.msra.mxu0 %v964
        %1482 = vmatpush.bf16.msra.mxu0 %v960
        %1483 = vmatpush.bf16.msra.mxu0 %v956
        %1484 = vmatpush.bf16.msra.mxu0 %v952
        %1485 = vmatpush.bf16.msra.mxu0 %v948
        %1486 = vmatpush.bf16.msra.mxu0 %v944
        %1487 = vmatmul.bf16.gmra.mxu0 %v1478
        %v1488 = vpop.f32.mrf.mxu0
        %v1489 = vadd.f32 0.0, %v1488
        %v1490 = vpop.f32.mrf.mxu0
        %1491 = vdwg.mxu0
        %1492 = vmatpush.bf16.msra.mxu0 %v973
        %1493 = vmatpush.bf16.msra.mxu0 %v969
        %1494 = vmatpush.bf16.msra.mxu0 %v965
        %1495 = vmatpush.bf16.msra.mxu0 %v961
        %1496 = vmatpush.bf16.msra.mxu0 %v957
        %1497 = vmatpush.bf16.msra.mxu0 %v953
        %1498 = vmatpush.bf16.msra.mxu0 %v949
        %1499 = vmatpush.bf16.msra.mxu0 %v945
        %1500 = vmatmul.bf16.gmra.mxu0 %v1478
        %v1501 = vpop.f32.mrf.mxu0
        %v1502 = vadd.f32 0.0, %v1501
        %v1503 = vpop.f32.mrf.mxu0
        %1504 = vdwg.mxu0
        %1505 = vmatpush.bf16.msra.mxu0 %v974
        %1506 = vmatpush.bf16.msra.mxu0 %v970
        %1507 = vmatpush.bf16.msra.mxu0 %v966
        %1508 = vmatpush.bf16.msra.mxu0 %v962
        %1509 = vmatpush.bf16.msra.mxu0 %v958
        %1510 = vmatpush.bf16.msra.mxu0 %v954
        %1511 = vmatpush.bf16.msra.mxu0 %v950
        %1512 = vmatpush.bf16.msra.mxu0 %v946
        %1513 = vmatmul.bf16.gmra.mxu0 %v1478
        %v1514 = vpop.f32.mrf.mxu0
        %v1515 = vadd.f32 0.0, %v1514
        %v1516 = vpop.f32.mrf.mxu0
        %1517 = vdwg.mxu0
        %1518 = vmatpush.bf16.msra.mxu0 %v975
        %1519 = vmatpush.bf16.msra.mxu0 %v971
        %1520 = vmatpush.bf16.msra.mxu0 %v967
        %1521 = vmatpush.bf16.msra.mxu0 %v963
        %1522 = vmatpush.bf16.msra.mxu0 %v959
        %1523 = vmatpush.bf16.msra.mxu0 %v955
        %1524 = vmatpush.bf16.msra.mxu0 %v951
        %1525 = vmatpush.bf16.msra.mxu0 %v947
        %1526 = vmatmul.bf16.gmra.mxu0 %v1478
        %v1527 = vpop.f32.mrf.mxu0
        %v1528 = vadd.f32 0.0, %v1527
        %v1529 = vpop.f32.mrf.mxu0
        %1530 = vdwg.mxu0
        %v1531 = vadd.f32 %v1474, %v1489
        %v1532 = vadd.f32 %v1475, %v1502
        %v1533 = vadd.f32 %v1476, %v1515
        %v1534 = vadd.f32 %v1477, %v1528
        %v1535 = vadd.f32 %v1531, %v1065
        %v1536 = vadd.f32 %v1532, %v1066
        %v1537 = vadd.f32 %v1533, %v1067
        %v1538 = vadd.f32 %v1534, %v1068
        %v1539 = vxor.u32 %v1535, 2147483648
        %v1540 = vmul.f32 %v1539, 1.442695
        %v1541 = vpow.pop %v1540
        %v1542 = vadd.f32 %v1541, 1.0
        %v1543 = vrcp.pop %v1542
        %v1544 = vmul.f32 %v1542, %v1543
        %v1545 = vsub.f32 1.0, %v1544
        %v1546 = vmul.f32 %v1543, %v1545
        %v1547 = vadd.f32 %v1543, %v1546
        %vm1548 = vweird.f32 %v1542
        %vm1549 = vweird.f32 %v1543
        %vm1550 = vmor %vm1548, %vm1549
        %v1551 = vsel %vm1550, %v1543, %v1547
        %v1552 = vand.u32 2147483647, %v1542
        %vm1553 = vcmp.eq.f32.partialorder %v1552, 8.507059e+37
        %v1554 = vand.u32 %v1542, 2147483648
        %v1555 = vor.u32 1.1754944e-38, %v1554
        %v1556 = vsel %vm1553, %v1555, %v1551
        %v1557 = vmul.f32 1.0, %v1556
        %v1558 = vxor.u32 %v1536, 2147483648
        %v1559 = vmul.f32 %v1558, 1.442695
        %v1560 = vpow.pop %v1559
        %v1561 = vadd.f32 %v1560, 1.0
        %v1562 = vrcp.pop %v1561
        %v1563 = vmul.f32 %v1561, %v1562
        %v1564 = vsub.f32 1.0, %v1563
        %v1565 = vmul.f32 %v1562, %v1564
        %v1566 = vadd.f32 %v1562, %v1565
        %vm1567 = vweird.f32 %v1561
        %vm1568 = vweird.f32 %v1562
        %vm1569 = vmor %vm1567, %vm1568
        %v1570 = vsel %vm1569, %v1562, %v1566
        %v1571 = vand.u32 2147483647, %v1561
        %vm1572 = vcmp.eq.f32.partialorder %v1571, 8.507059e+37
        %v1573 = vand.u32 %v1561, 2147483648
        %v1574 = vor.u32 1.1754944e-38, %v1573
        %v1575 = vsel %vm1572, %v1574, %v1570
        %v1576 = vmul.f32 1.0, %v1575
        %v1577 = vtanh.pop %v1537
        %v1578 = vxor.u32 %v1538, 2147483648
        %v1579 = vmul.f32 %v1578, 1.442695
        %v1580 = vpow.pop %v1579
        %v1581 = vadd.f32 %v1580, 1.0
        %v1582 = vrcp.pop %v1581
        %v1583 = vmul.f32 %v1581, %v1582
        %v1584 = vsub.f32 1.0, %v1583
        %v1585 = vmul.f32 %v1582, %v1584
        %v1586 = vadd.f32 %v1582, %v1585
        %vm1587 = vweird.f32 %v1581
        %vm1588 = vweird.f32 %v1582
        %vm1589 = vmor %vm1587, %vm1588
        %v1590 = vsel %vm1589, %v1582, %v1586
        %v1591 = vand.u32 2147483647, %v1581
        %vm1592 = vcmp.eq.f32.partialorder %v1591, 8.507059e+37
        %v1593 = vand.u32 %v1581, 2147483648
        %v1594 = vor.u32 1.1754944e-38, %v1593
        %v1595 = vsel %vm1592, %v1594, %v1590
        %v1596 = vmul.f32 1.0, %v1595
        %v1597 = vmul.f32 %v1576, %v1453
        %v1598 = vmul.f32 %v1557, %v1577
        %v1599 = vadd.f32 %v1597, %v1598
        %v1600 = vtanh.pop %v1599
        %v1601 = vmul.f32 %v1596, %v1600
        %p1602 = scmp.lt.s32.totalorder %s1466, 8
        %s1603 = scalar_select %p1602, 1, 0
        %v1604 = vstv %s1603
        %vm1605 = vcmp.eq.s32.totalorder %v1604, 1
        %v1606 = vsel %vm1605, %v1601, %v1452
        %v1607 = vsel %vm1605, %v1599, %v1453
        %v1608 = vmax.f32 %v1455, %v1601
        %v1609 = vsel %vm1605, %v1608, %v1455
        %v1610 = vstv %s1466
        %vm1611 = vcmp.eq.s32.totalorder %v796, %v1610
        %v1612 = vsel %vm1611, 1, 0
        %1613 = vset.pattern.permute.xlu0 0
        %1614 = vperm.xlu0 %1613, %v1612
        %v1615 = vpop.permute.xlu0 %1614
        %vm1616 = vcmp.eq.s32.totalorder %v1615, 1
        %v1617 = vsel %vm1616, %v1601, %v1463
        %s1618 = sadd.s32 %s797, 4
        %s1619 = ssub.s32 3, %s797
        %s1620 = scalar_select %p410, %s1619, %s1618
        %s1621 = scalar_select %p410, 3, 4
        %s1622 = smul.u32 %s1621, 8
        %s1623 = sshra.s32 %s1622, 3
        %s1624 = sand.u32 %s1622, 7
        %s1625 = smul.u32 %s1623, 4
        %s1626 = smul.addr %s1625, 8
        %s1627 = scalar_lea.vmem [#allocation2], %s1626
        %v1628 = vld [vmem:[%s1627] sm:$0xff]
        %v1629 = vld [vmem:[%s1627 + $0x8] sm:$0xff]
        %v1630 = vld [vmem:[%s1627 + $0x10] sm:$0xff]
        %v1631 = vld [vmem:[%s1627 + $0x18] sm:$0xff]
        %v1632 = vpack.c.bf16 %v1606, %v1606
        %1633 = vmatpush.bf16.msra.mxu0 %v972
        %1634 = vmatpush.bf16.msra.mxu0 %v968
        %1635 = vmatpush.bf16.msra.mxu0 %v964
        %1636 = vmatpush.bf16.msra.mxu0 %v960
        %1637 = vmatpush.bf16.msra.mxu0 %v956
        %1638 = vmatpush.bf16.msra.mxu0 %v952
        %1639 = vmatpush.bf16.msra.mxu0 %v948
        %1640 = vmatpush.bf16.msra.mxu0 %v944
        %1641 = vmatmul.bf16.gmra.mxu0 %v1632
        %v1642 = vpop.f32.mrf.mxu0
        %v1643 = vadd.f32 0.0, %v1642
        %v1644 = vpop.f32.mrf.mxu0
        %1645 = vdwg.mxu0
        %1646 = vmatpush.bf16.msra.mxu0 %v973
        %1647 = vmatpush.bf16.msra.mxu0 %v969
        %1648 = vmatpush.bf16.msra.mxu0 %v965
        %1649 = vmatpush.bf16.msra.mxu0 %v961
        %1650 = vmatpush.bf16.msra.mxu0 %v957
        %1651 = vmatpush.bf16.msra.mxu0 %v953
        %1652 = vmatpush.bf16.msra.mxu0 %v949
        %1653 = vmatpush.bf16.msra.mxu0 %v945
        %1654 = vmatmul.bf16.gmra.mxu0 %v1632
        %v1655 = vpop.f32.mrf.mxu0
        %v1656 = vadd.f32 0.0, %v1655
        %v1657 = vpop.f32.mrf.mxu0
        %1658 = vdwg.mxu0
        %1659 = vmatpush.bf16.msra.mxu0 %v974
        %1660 = vmatpush.bf16.msra.mxu0 %v970
        %1661 = vmatpush.bf16.msra.mxu0 %v966
        %1662 = vmatpush.bf16.msra.mxu0 %v962
        %1663 = vmatpush.bf16.msra.mxu0 %v958
        %1664 = vmatpush.bf16.msra.mxu0 %v954
        %1665 = vmatpush.bf16.msra.mxu0 %v950
        %1666 = vmatpush.bf16.msra.mxu0 %v946
        %1667 = vmatmul.bf16.gmra.mxu0 %v1632
        %v1668 = vpop.f32.mrf.mxu0
        %v1669 = vadd.f32 0.0, %v1668
        %v1670 = vpop.f32.mrf.mxu0
        %1671 = vdwg.mxu0
        %1672 = vmatpush.bf16.msra.mxu0 %v975
        %1673 = vmatpush.bf16.msra.mxu0 %v971
        %1674 = vmatpush.bf16.msra.mxu0 %v967
        %1675 = vmatpush.bf16.msra.mxu0 %v963
        %1676 = vmatpush.bf16.msra.mxu0 %v959
        %1677 = vmatpush.bf16.msra.mxu0 %v955
        %1678 = vmatpush.bf16.msra.mxu0 %v951
        %1679 = vmatpush.bf16.msra.mxu0 %v947
        %1680 = vmatmul.bf16.gmra.mxu0 %v1632
        %v1681 = vpop.f32.mrf.mxu0
        %v1682 = vadd.f32 0.0, %v1681
        %v1683 = vpop.f32.mrf.mxu0
        %1684 = vdwg.mxu0
        %v1685 = vadd.f32 %v1628, %v1643
        %v1686 = vadd.f32 %v1629, %v1656
        %v1687 = vadd.f32 %v1630, %v1669
        %v1688 = vadd.f32 %v1631, %v1682
        %v1689 = vadd.f32 %v1685, %v1065
        %v1690 = vadd.f32 %v1686, %v1066
        %v1691 = vadd.f32 %v1687, %v1067
        %v1692 = vadd.f32 %v1688, %v1068
        %v1693 = vxor.u32 %v1689, 2147483648
        %v1694 = vmul.f32 %v1693, 1.442695
        %v1695 = vpow.pop %v1694
        %v1696 = vadd.f32 %v1695, 1.0
        %v1697 = vrcp.pop %v1696
        %v1698 = vmul.f32 %v1696, %v1697
        %v1699 = vsub.f32 1.0, %v1698
        %v1700 = vmul.f32 %v1697, %v1699
        %v1701 = vadd.f32 %v1697, %v1700
        %vm1702 = vweird.f32 %v1696
        %vm1703 = vweird.f32 %v1697
        %vm1704 = vmor %vm1702, %vm1703
        %v1705 = vsel %vm1704, %v1697, %v1701
        %v1706 = vand.u32 2147483647, %v1696
        %vm1707 = vcmp.eq.f32.partialorder %v1706, 8.507059e+37
        %v1708 = vand.u32 %v1696, 2147483648
        %v1709 = vor.u32 1.1754944e-38, %v1708
        %v1710 = vsel %vm1707, %v1709, %v1705
        %v1711 = vmul.f32 1.0, %v1710
        %v1712 = vxor.u32 %v1690, 2147483648
        %v1713 = vmul.f32 %v1712, 1.442695
        %v1714 = vpow.pop %v1713
        %v1715 = vadd.f32 %v1714, 1.0
        %v1716 = vrcp.pop %v1715
        %v1717 = vmul.f32 %v1715, %v1716
        %v1718 = vsub.f32 1.0, %v1717
        %v1719 = vmul.f32 %v1716, %v1718
        %v1720 = vadd.f32 %v1716, %v1719
        %vm1721 = vweird.f32 %v1715
        %vm1722 = vweird.f32 %v1716
        %vm1723 = vmor %vm1721, %vm1722
        %v1724 = vsel %vm1723, %v1716, %v1720
        %v1725 = vand.u32 2147483647, %v1715
        %vm1726 = vcmp.eq.f32.partialorder %v1725, 8.507059e+37
        %v1727 = vand.u32 %v1715, 2147483648
        %v1728 = vor.u32 1.1754944e-38, %v1727
        %v1729 = vsel %vm1726, %v1728, %v1724
        %v1730 = vmul.f32 1.0, %v1729
        %v1731 = vtanh.pop %v1691
        %v1732 = vxor.u32 %v1692, 2147483648
        %v1733 = vmul.f32 %v1732, 1.442695
        %v1734 = vpow.pop %v1733
        %v1735 = vadd.f32 %v1734, 1.0
        %v1736 = vrcp.pop %v1735
        %v1737 = vmul.f32 %v1735, %v1736
        %v1738 = vsub.f32 1.0, %v1737
        %v1739 = vmul.f32 %v1736, %v1738
        %v1740 = vadd.f32 %v1736, %v1739
        %vm1741 = vweird.f32 %v1735
        %vm1742 = vweird.f32 %v1736
        %vm1743 = vmor %vm1741, %vm1742
        %v1744 = vsel %vm1743, %v1736, %v1740
        %v1745 = vand.u32 2147483647, %v1735
        %vm1746 = vcmp.eq.f32.partialorder %v1745, 8.507059e+37
        %v1747 = vand.u32 %v1735, 2147483648
        %v1748 = vor.u32 1.1754944e-38, %v1747
        %v1749 = vsel %vm1746, %v1748, %v1744
        %v1750 = vmul.f32 1.0, %v1749
        %v1751 = vmul.f32 %v1730, %v1607
        %v1752 = vmul.f32 %v1711, %v1731
        %v1753 = vadd.f32 %v1751, %v1752
        %v1754 = vtanh.pop %v1753
        %v1755 = vmul.f32 %v1750, %v1754
        %p1756 = scmp.lt.s32.totalorder %s1620, 8
        %s1757 = scalar_select %p1756, 1, 0
        %v1758 = vstv %s1757
        %vm1759 = vcmp.eq.s32.totalorder %v1758, 1
        %v1760 = vsel %vm1759, %v1755, %v1606
        %v1761 = vsel %vm1759, %v1753, %v1607
        %v1762 = vmax.f32 %v1609, %v1755
        %v1763 = vsel %vm1759, %v1762, %v1609
        %v1764 = vstv %s1620
        %vm1765 = vcmp.eq.s32.totalorder %v796, %v1764
        %v1766 = vsel %vm1765, 1, 0
        %1767 = vset.pattern.permute.xlu0 0
        %1768 = vperm.xlu0 %1767, %v1766
        %v1769 = vpop.permute.xlu0 %1768
        %vm1770 = vcmp.eq.s32.totalorder %v1769, 1
        %v1771 = vsel %vm1770, %v1755, %v1617
        %s1772 = sadd.s32 %s797, 5
        %s1773 = ssub.s32 2, %s797
        %s1774 = scalar_select %p410, %s1773, %s1772
        %s1775 = scalar_select %p410, 2, 5
        %s1776 = smul.u32 %s1775, 8
        %s1777 = sshra.s32 %s1776, 3
        %s1778 = sand.u32 %s1776, 7
        %s1779 = smul.u32 %s1777, 4
        %s1780 = smul.addr %s1779, 8
        %s1781 = scalar_lea.vmem [#allocation2], %s1780
        %v1782 = vld [vmem:[%s1781] sm:$0xff]
        %v1783 = vld [vmem:[%s1781 + $0x8] sm:$0xff]
        %v1784 = vld [vmem:[%s1781 + $0x10] sm:$0xff]
        %v1785 = vld [vmem:[%s1781 + $0x18] sm:$0xff]
        %v1786 = vpack.c.bf16 %v1760, %v1760
        %1787 = vmatpush.bf16.msra.mxu0 %v972
        %1788 = vmatpush.bf16.msra.mxu0 %v968
        %1789 = vmatpush.bf16.msra.mxu0 %v964
        %1790 = vmatpush.bf16.msra.mxu0 %v960
        %1791 = vmatpush.bf16.msra.mxu0 %v956
        %1792 = vmatpush.bf16.msra.mxu0 %v952
        %1793 = vmatpush.bf16.msra.mxu0 %v948
        %1794 = vmatpush.bf16.msra.mxu0 %v944
        %1795 = vmatmul.bf16.gmra.mxu0 %v1786
        %v1796 = vpop.f32.mrf.mxu0
        %v1797 = vadd.f32 0.0, %v1796
        %v1798 = vpop.f32.mrf.mxu0
        %1799 = vdwg.mxu0
        %1800 = vmatpush.bf16.msra.mxu0 %v973
        %1801 = vmatpush.bf16.msra.mxu0 %v969
        %1802 = vmatpush.bf16.msra.mxu0 %v965
        %1803 = vmatpush.bf16.msra.mxu0 %v961
        %1804 = vmatpush.bf16.msra.mxu0 %v957
        %1805 = vmatpush.bf16.msra.mxu0 %v953
        %1806 = vmatpush.bf16.msra.mxu0 %v949
        %1807 = vmatpush.bf16.msra.mxu0 %v945
        %1808 = vmatmul.bf16.gmra.mxu0 %v1786
        %v1809 = vpop.f32.mrf.mxu0
        %v1810 = vadd.f32 0.0, %v1809
        %v1811 = vpop.f32.mrf.mxu0
        %1812 = vdwg.mxu0
        %1813 = vmatpush.bf16.msra.mxu0 %v974
        %1814 = vmatpush.bf16.msra.mxu0 %v970
        %1815 = vmatpush.bf16.msra.mxu0 %v966
        %1816 = vmatpush.bf16.msra.mxu0 %v962
        %1817 = vmatpush.bf16.msra.mxu0 %v958
        %1818 = vmatpush.bf16.msra.mxu0 %v954
        %1819 = vmatpush.bf16.msra.mxu0 %v950
        %1820 = vmatpush.bf16.msra.mxu0 %v946
        %1821 = vmatmul.bf16.gmra.mxu0 %v1786
        %v1822 = vpop.f32.mrf.mxu0
        %v1823 = vadd.f32 0.0, %v1822
        %v1824 = vpop.f32.mrf.mxu0
        %1825 = vdwg.mxu0
        %1826 = vmatpush.bf16.msra.mxu0 %v975
        %1827 = vmatpush.bf16.msra.mxu0 %v971
        %1828 = vmatpush.bf16.msra.mxu0 %v967
        %1829 = vmatpush.bf16.msra.mxu0 %v963
        %1830 = vmatpush.bf16.msra.mxu0 %v959
        %1831 = vmatpush.bf16.msra.mxu0 %v955
        %1832 = vmatpush.bf16.msra.mxu0 %v951
        %1833 = vmatpush.bf16.msra.mxu0 %v947
        %1834 = vmatmul.bf16.gmra.mxu0 %v1786
        %v1835 = vpop.f32.mrf.mxu0
        %v1836 = vadd.f32 0.0, %v1835
        %v1837 = vpop.f32.mrf.mxu0
        %1838 = vdwg.mxu0
        %v1839 = vadd.f32 %v1782, %v1797
        %v1840 = vadd.f32 %v1783, %v1810
        %v1841 = vadd.f32 %v1784, %v1823
        %v1842 = vadd.f32 %v1785, %v1836
        %v1843 = vadd.f32 %v1839, %v1065
        %v1844 = vadd.f32 %v1840, %v1066
        %v1845 = vadd.f32 %v1841, %v1067
        %v1846 = vadd.f32 %v1842, %v1068
        %v1847 = vxor.u32 %v1843, 2147483648
        %v1848 = vmul.f32 %v1847, 1.442695
        %v1849 = vpow.pop %v1848
        %v1850 = vadd.f32 %v1849, 1.0
        %v1851 = vrcp.pop %v1850
        %v1852 = vmul.f32 %v1850, %v1851
        %v1853 = vsub.f32 1.0, %v1852
        %v1854 = vmul.f32 %v1851, %v1853
        %v1855 = vadd.f32 %v1851, %v1854
        %vm1856 = vweird.f32 %v1850
        %vm1857 = vweird.f32 %v1851
        %vm1858 = vmor %vm1856, %vm1857
        %v1859 = vsel %vm1858, %v1851, %v1855
        %v1860 = vand.u32 2147483647, %v1850
        %vm1861 = vcmp.eq.f32.partialorder %v1860, 8.507059e+37
        %v1862 = vand.u32 %v1850, 2147483648
        %v1863 = vor.u32 1.1754944e-38, %v1862
        %v1864 = vsel %vm1861, %v1863, %v1859
        %v1865 = vmul.f32 1.0, %v1864
        %v1866 = vxor.u32 %v1844, 2147483648
        %v1867 = vmul.f32 %v1866, 1.442695
        %v1868 = vpow.pop %v1867
        %v1869 = vadd.f32 %v1868, 1.0
        %v1870 = vrcp.pop %v1869
        %v1871 = vmul.f32 %v1869, %v1870
        %v1872 = vsub.f32 1.0, %v1871
        %v1873 = vmul.f32 %v1870, %v1872
        %v1874 = vadd.f32 %v1870, %v1873
        %vm1875 = vweird.f32 %v1869
        %vm1876 = vweird.f32 %v1870
        %vm1877 = vmor %vm1875, %vm1876
        %v1878 = vsel %vm1877, %v1870, %v1874
        %v1879 = vand.u32 2147483647, %v1869
        %vm1880 = vcmp.eq.f32.partialorder %v1879, 8.507059e+37
        %v1881 = vand.u32 %v1869, 2147483648
        %v1882 = vor.u32 1.1754944e-38, %v1881
        %v1883 = vsel %vm1880, %v1882, %v1878
        %v1884 = vmul.f32 1.0, %v1883
        %v1885 = vtanh.pop %v1845
        %v1886 = vxor.u32 %v1846, 2147483648
        %v1887 = vmul.f32 %v1886, 1.442695
        %v1888 = vpow.pop %v1887
        %v1889 = vadd.f32 %v1888, 1.0
        %v1890 = vrcp.pop %v1889
        %v1891 = vmul.f32 %v1889, %v1890
        %v1892 = vsub.f32 1.0, %v1891
        %v1893 = vmul.f32 %v1890, %v1892
        %v1894 = vadd.f32 %v1890, %v1893
        %vm1895 = vweird.f32 %v1889
        %vm1896 = vweird.f32 %v1890
        %vm1897 = vmor %vm1895, %vm1896
        %v1898 = vsel %vm1897, %v1890, %v1894
        %v1899 = vand.u32 2147483647, %v1889
        %vm1900 = vcmp.eq.f32.partialorder %v1899, 8.507059e+37
        %v1901 = vand.u32 %v1889, 2147483648
        %v1902 = vor.u32 1.1754944e-38, %v1901
        %v1903 = vsel %vm1900, %v1902, %v1898
        %v1904 = vmul.f32 1.0, %v1903
        %v1905 = vmul.f32 %v1884, %v1761
        %v1906 = vmul.f32 %v1865, %v1885
        %v1907 = vadd.f32 %v1905, %v1906
        %v1908 = vtanh.pop %v1907
        %v1909 = vmul.f32 %v1904, %v1908
        %p1910 = scmp.lt.s32.totalorder %s1774, 8
        %s1911 = scalar_select %p1910, 1, 0
        %v1912 = vstv %s1911
        %vm1913 = vcmp.eq.s32.totalorder %v1912, 1
        %v1914 = vsel %vm1913, %v1909, %v1760
        %v1915 = vsel %vm1913, %v1907, %v1761
        %v1916 = vmax.f32 %v1763, %v1909
        %v1917 = vsel %vm1913, %v1916, %v1763
        %v1918 = vstv %s1774
        %vm1919 = vcmp.eq.s32.totalorder %v796, %v1918
        %v1920 = vsel %vm1919, 1, 0
        %1921 = vset.pattern.permute.xlu0 0
        %1922 = vperm.xlu0 %1921, %v1920
        %v1923 = vpop.permute.xlu0 %1922
        %vm1924 = vcmp.eq.s32.totalorder %v1923, 1
        %v1925 = vsel %vm1924, %v1909, %v1771
        %s1926 = sadd.s32 %s797, 6
        %s1927 = ssub.s32 1, %s797
        %s1928 = scalar_select %p410, %s1927, %s1926
        %s1929 = scalar_select %p410, 1, 6
        %s1930 = smul.u32 %s1929, 8
        %s1931 = sshra.s32 %s1930, 3
        %s1932 = sand.u32 %s1930, 7
        %s1933 = smul.u32 %s1931, 4
        %s1934 = smul.addr %s1933, 8
        %s1935 = scalar_lea.vmem [#allocation2], %s1934
        %v1936 = vld [vmem:[%s1935] sm:$0xff]
        %v1937 = vld [vmem:[%s1935 + $0x8] sm:$0xff]
        %v1938 = vld [vmem:[%s1935 + $0x10] sm:$0xff]
        %v1939 = vld [vmem:[%s1935 + $0x18] sm:$0xff]
        %v1940 = vpack.c.bf16 %v1914, %v1914
        %1941 = vmatpush.bf16.msra.mxu0 %v972
        %1942 = vmatpush.bf16.msra.mxu0 %v968
        %1943 = vmatpush.bf16.msra.mxu0 %v964
        %1944 = vmatpush.bf16.msra.mxu0 %v960
        %1945 = vmatpush.bf16.msra.mxu0 %v956
        %1946 = vmatpush.bf16.msra.mxu0 %v952
        %1947 = vmatpush.bf16.msra.mxu0 %v948
        %1948 = vmatpush.bf16.msra.mxu0 %v944
        %1949 = vmatmul.bf16.gmra.mxu0 %v1940
        %v1950 = vpop.f32.mrf.mxu0
        %v1951 = vadd.f32 0.0, %v1950
        %v1952 = vpop.f32.mrf.mxu0
        %1953 = vdwg.mxu0
        %1954 = vmatpush.bf16.msra.mxu0 %v973
        %1955 = vmatpush.bf16.msra.mxu0 %v969
        %1956 = vmatpush.bf16.msra.mxu0 %v965
        %1957 = vmatpush.bf16.msra.mxu0 %v961
        %1958 = vmatpush.bf16.msra.mxu0 %v957
        %1959 = vmatpush.bf16.msra.mxu0 %v953
        %1960 = vmatpush.bf16.msra.mxu0 %v949
        %1961 = vmatpush.bf16.msra.mxu0 %v945
        %1962 = vmatmul.bf16.gmra.mxu0 %v1940
        %v1963 = vpop.f32.mrf.mxu0
        %v1964 = vadd.f32 0.0, %v1963
        %v1965 = vpop.f32.mrf.mxu0
        %1966 = vdwg.mxu0
        %1967 = vmatpush.bf16.msra.mxu0 %v974
        %1968 = vmatpush.bf16.msra.mxu0 %v970
        %1969 = vmatpush.bf16.msra.mxu0 %v966
        %1970 = vmatpush.bf16.msra.mxu0 %v962
        %1971 = vmatpush.bf16.msra.mxu0 %v958
        %1972 = vmatpush.bf16.msra.mxu0 %v954
        %1973 = vmatpush.bf16.msra.mxu0 %v950
        %1974 = vmatpush.bf16.msra.mxu0 %v946
        %1975 = vmatmul.bf16.gmra.mxu0 %v1940
        %v1976 = vpop.f32.mrf.mxu0
        %v1977 = vadd.f32 0.0, %v1976
        %v1978 = vpop.f32.mrf.mxu0
        %1979 = vdwg.mxu0
        %1980 = vmatpush.bf16.msra.mxu0 %v975
        %1981 = vmatpush.bf16.msra.mxu0 %v971
        %1982 = vmatpush.bf16.msra.mxu0 %v967
        %1983 = vmatpush.bf16.msra.mxu0 %v963
        %1984 = vmatpush.bf16.msra.mxu0 %v959
        %1985 = vmatpush.bf16.msra.mxu0 %v955
        %1986 = vmatpush.bf16.msra.mxu0 %v951
        %1987 = vmatpush.bf16.msra.mxu0 %v947
        %1988 = vmatmul.bf16.gmra.mxu0 %v1940
        %v1989 = vpop.f32.mrf.mxu0
        %v1990 = vadd.f32 0.0, %v1989
        %v1991 = vpop.f32.mrf.mxu0
        %1992 = vdwg.mxu0
        %v1993 = vadd.f32 %v1936, %v1951
        %v1994 = vadd.f32 %v1937, %v1964
        %v1995 = vadd.f32 %v1938, %v1977
        %v1996 = vadd.f32 %v1939, %v1990
        %v1997 = vadd.f32 %v1993, %v1065
        %v1998 = vadd.f32 %v1994, %v1066
        %v1999 = vadd.f32 %v1995, %v1067
        %v2000 = vadd.f32 %v1996, %v1068
        %v2001 = vxor.u32 %v1997, 2147483648
        %v2002 = vmul.f32 %v2001, 1.442695
        %v2003 = vpow.pop %v2002
        %v2004 = vadd.f32 %v2003, 1.0
        %v2005 = vrcp.pop %v2004
        %v2006 = vmul.f32 %v2004, %v2005
        %v2007 = vsub.f32 1.0, %v2006
        %v2008 = vmul.f32 %v2005, %v2007
        %v2009 = vadd.f32 %v2005, %v2008
        %vm2010 = vweird.f32 %v2004
        %vm2011 = vweird.f32 %v2005
        %vm2012 = vmor %vm2010, %vm2011
        %v2013 = vsel %vm2012, %v2005, %v2009
        %v2014 = vand.u32 2147483647, %v2004
        %vm2015 = vcmp.eq.f32.partialorder %v2014, 8.507059e+37
        %v2016 = vand.u32 %v2004, 2147483648
        %v2017 = vor.u32 1.1754944e-38, %v2016
        %v2018 = vsel %vm2015, %v2017, %v2013
        %v2019 = vmul.f32 1.0, %v2018
        %v2020 = vxor.u32 %v1998, 2147483648
        %v2021 = vmul.f32 %v2020, 1.442695
        %v2022 = vpow.pop %v2021
        %v2023 = vadd.f32 %v2022, 1.0
        %v2024 = vrcp.pop %v2023
        %v2025 = vmul.f32 %v2023, %v2024
        %v2026 = vsub.f32 1.0, %v2025
        %v2027 = vmul.f32 %v2024, %v2026
        %v2028 = vadd.f32 %v2024, %v2027
        %vm2029 = vweird.f32 %v2023
        %vm2030 = vweird.f32 %v2024
        %vm2031 = vmor %vm2029, %vm2030
        %v2032 = vsel %vm2031, %v2024, %v2028
        %v2033 = vand.u32 2147483647, %v2023
        %vm2034 = vcmp.eq.f32.partialorder %v2033, 8.507059e+37
        %v2035 = vand.u32 %v2023, 2147483648
        %v2036 = vor.u32 1.1754944e-38, %v2035
        %v2037 = vsel %vm2034, %v2036, %v2032
        %v2038 = vmul.f32 1.0, %v2037
        %v2039 = vtanh.pop %v1999
        %v2040 = vxor.u32 %v2000, 2147483648
        %v2041 = vmul.f32 %v2040, 1.442695
        %v2042 = vpow.pop %v2041
        %v2043 = vadd.f32 %v2042, 1.0
        %v2044 = vrcp.pop %v2043
        %v2045 = vmul.f32 %v2043, %v2044
        %v2046 = vsub.f32 1.0, %v2045
        %v2047 = vmul.f32 %v2044, %v2046
        %v2048 = vadd.f32 %v2044, %v2047
        %vm2049 = vweird.f32 %v2043
        %vm2050 = vweird.f32 %v2044
        %vm2051 = vmor %vm2049, %vm2050
        %v2052 = vsel %vm2051, %v2044, %v2048
        %v2053 = vand.u32 2147483647, %v2043
        %vm2054 = vcmp.eq.f32.partialorder %v2053, 8.507059e+37
        %v2055 = vand.u32 %v2043, 2147483648
        %v2056 = vor.u32 1.1754944e-38, %v2055
        %v2057 = vsel %vm2054, %v2056, %v2052
        %v2058 = vmul.f32 1.0, %v2057
        %v2059 = vmul.f32 %v2038, %v1915
        %v2060 = vmul.f32 %v2019, %v2039
        %v2061 = vadd.f32 %v2059, %v2060
        %v2062 = vtanh.pop %v2061
        %v2063 = vmul.f32 %v2058, %v2062
        %p2064 = scmp.lt.s32.totalorder %s1928, 8
        %s2065 = scalar_select %p2064, 1, 0
        %v2066 = vstv %s2065
        %vm2067 = vcmp.eq.s32.totalorder %v2066, 1
        %v2068 = vsel %vm2067, %v2063, %v1914
        %v2069 = vsel %vm2067, %v2061, %v1915
        %v2070 = vmax.f32 %v1917, %v2063
        %v2071 = vsel %vm2067, %v2070, %v1917
        %v2072 = vstv %s1928
        %vm2073 = vcmp.eq.s32.totalorder %v796, %v2072
        %v2074 = vsel %vm2073, 1, 0
        %2075 = vset.pattern.permute.xlu0 0
        %2076 = vperm.xlu0 %2075, %v2074
        %v2077 = vpop.permute.xlu0 %2076
        %vm2078 = vcmp.eq.s32.totalorder %v2077, 1
        %v2079 = vsel %vm2078, %v2063, %v1925
        %s2080 = sadd.s32 %s797, 7
        %s2081 = ssub.s32 0, %s797
        %s2082 = scalar_select %p410, %s2081, %s2080
        %s2083 = scalar_select %p410, 0, 7
        %s2084 = smul.u32 %s2083, 8
        %s2085 = sshra.s32 %s2084, 3
        %s2086 = sand.u32 %s2084, 7
        %s2087 = smul.u32 %s2085, 4
        %s2088 = smul.addr %s2087, 8
        %s2089 = scalar_lea.vmem [#allocation2], %s2088
        %v2090 = vld [vmem:[%s2089] sm:$0xff]
        %v2091 = vld [vmem:[%s2089 + $0x8] sm:$0xff]
        %v2092 = vld [vmem:[%s2089 + $0x10] sm:$0xff]
        %v2093 = vld [vmem:[%s2089 + $0x18] sm:$0xff]
        %v2094 = vpack.c.bf16 %v2068, %v2068
        %2095 = vmatpush.bf16.msra.mxu0 %v972
        %2096 = vmatpush.bf16.msra.mxu0 %v968
        %2097 = vmatpush.bf16.msra.mxu0 %v964
        %2098 = vmatpush.bf16.msra.mxu0 %v960
        %2099 = vmatpush.bf16.msra.mxu0 %v956
        %2100 = vmatpush.bf16.msra.mxu0 %v952
        %2101 = vmatpush.bf16.msra.mxu0 %v948
        %2102 = vmatpush.bf16.msra.mxu0 %v944
        %2103 = vmatmul.bf16.gmra.mxu0 %v2094
        %v2104 = vpop.f32.mrf.mxu0
        %v2105 = vadd.f32 0.0, %v2104
        %v2106 = vpop.f32.mrf.mxu0
        %2107 = vdwg.mxu0
        %2108 = vmatpush.bf16.msra.mxu0 %v973
        %2109 = vmatpush.bf16.msra.mxu0 %v969
        %2110 = vmatpush.bf16.msra.mxu0 %v965
        %2111 = vmatpush.bf16.msra.mxu0 %v961
        %2112 = vmatpush.bf16.msra.mxu0 %v957
        %2113 = vmatpush.bf16.msra.mxu0 %v953
        %2114 = vmatpush.bf16.msra.mxu0 %v949
        %2115 = vmatpush.bf16.msra.mxu0 %v945
        %2116 = vmatmul.bf16.gmra.mxu0 %v2094
        %v2117 = vpop.f32.mrf.mxu0
        %v2118 = vadd.f32 0.0, %v2117
        %v2119 = vpop.f32.mrf.mxu0
        %2120 = vdwg.mxu0
        %2121 = vmatpush.bf16.msra.mxu0 %v974
        %2122 = vmatpush.bf16.msra.mxu0 %v970
        %2123 = vmatpush.bf16.msra.mxu0 %v966
        %2124 = vmatpush.bf16.msra.mxu0 %v962
        %2125 = vmatpush.bf16.msra.mxu0 %v958
        %2126 = vmatpush.bf16.msra.mxu0 %v954
        %2127 = vmatpush.bf16.msra.mxu0 %v950
        %2128 = vmatpush.bf16.msra.mxu0 %v946
        %2129 = vmatmul.bf16.gmra.mxu0 %v2094
        %v2130 = vpop.f32.mrf.mxu0
        %v2131 = vadd.f32 0.0, %v2130
        %v2132 = vpop.f32.mrf.mxu0
        %2133 = vdwg.mxu0
        %2134 = vmatpush.bf16.msra.mxu0 %v975
        %2135 = vmatpush.bf16.msra.mxu0 %v971
        %2136 = vmatpush.bf16.msra.mxu0 %v967
        %2137 = vmatpush.bf16.msra.mxu0 %v963
        %2138 = vmatpush.bf16.msra.mxu0 %v959
        %2139 = vmatpush.bf16.msra.mxu0 %v955
        %2140 = vmatpush.bf16.msra.mxu0 %v951
        %2141 = vmatpush.bf16.msra.mxu0 %v947
        %2142 = vmatmul.bf16.gmra.mxu0 %v2094
        %v2143 = vpop.f32.mrf.mxu0
        %v2144 = vadd.f32 0.0, %v2143
        %v2145 = vpop.f32.mrf.mxu0
        %2146 = vdwg.mxu0
        %v2147 = vadd.f32 %v2090, %v2105
        %v2148 = vadd.f32 %v2091, %v2118
        %v2149 = vadd.f32 %v2092, %v2131
        %v2150 = vadd.f32 %v2093, %v2144
        %v2151 = vadd.f32 %v2147, %v1065
        %v2152 = vadd.f32 %v2148, %v1066
        %v2153 = vadd.f32 %v2149, %v1067
        %v2154 = vadd.f32 %v2150, %v1068
        %v2155 = vxor.u32 %v2151, 2147483648
        %v2156 = vmul.f32 %v2155, 1.442695
        %v2157 = vpow.pop %v2156
        %v2158 = vadd.f32 %v2157, 1.0
        %v2159 = vrcp.pop %v2158
        %v2160 = vmul.f32 %v2158, %v2159
        %v2161 = vsub.f32 1.0, %v2160
        %v2162 = vmul.f32 %v2159, %v2161
        %v2163 = vadd.f32 %v2159, %v2162
        %vm2164 = vweird.f32 %v2158
        %vm2165 = vweird.f32 %v2159
        %vm2166 = vmor %vm2164, %vm2165
        %v2167 = vsel %vm2166, %v2159, %v2163
        %v2168 = vand.u32 2147483647, %v2158
        %vm2169 = vcmp.eq.f32.partialorder %v2168, 8.507059e+37
        %v2170 = vand.u32 %v2158, 2147483648
        %v2171 = vor.u32 1.1754944e-38, %v2170
        %v2172 = vsel %vm2169, %v2171, %v2167
        %v2173 = vmul.f32 1.0, %v2172
        %v2174 = vxor.u32 %v2152, 2147483648
        %v2175 = vmul.f32 %v2174, 1.442695
        %v2176 = vpow.pop %v2175
        %v2177 = vadd.f32 %v2176, 1.0
        %v2178 = vrcp.pop %v2177
        %v2179 = vmul.f32 %v2177, %v2178
        %v2180 = vsub.f32 1.0, %v2179
        %v2181 = vmul.f32 %v2178, %v2180
        %v2182 = vadd.f32 %v2178, %v2181
        %vm2183 = vweird.f32 %v2177
        %vm2184 = vweird.f32 %v2178
        %vm2185 = vmor %vm2183, %vm2184
        %v2186 = vsel %vm2185, %v2178, %v2182
        %v2187 = vand.u32 2147483647, %v2177
        %vm2188 = vcmp.eq.f32.partialorder %v2187, 8.507059e+37
        %v2189 = vand.u32 %v2177, 2147483648
        %v2190 = vor.u32 1.1754944e-38, %v2189
        %v2191 = vsel %vm2188, %v2190, %v2186
        %v2192 = vmul.f32 1.0, %v2191
        %v2193 = vtanh.pop %v2153
        %v2194 = vxor.u32 %v2154, 2147483648
        %v2195 = vmul.f32 %v2194, 1.442695
        %v2196 = vpow.pop %v2195
        %v2197 = vadd.f32 %v2196, 1.0
        %v2198 = vrcp.pop %v2197
        %v2199 = vmul.f32 %v2197, %v2198
        %v2200 = vsub.f32 1.0, %v2199
        %v2201 = vmul.f32 %v2198, %v2200
        %v2202 = vadd.f32 %v2198, %v2201
        %vm2203 = vweird.f32 %v2197
        %vm2204 = vweird.f32 %v2198
        %vm2205 = vmor %vm2203, %vm2204
        %v2206 = vsel %vm2205, %v2198, %v2202
        %v2207 = vand.u32 2147483647, %v2197
        %vm2208 = vcmp.eq.f32.partialorder %v2207, 8.507059e+37
        %v2209 = vand.u32 %v2197, 2147483648
        %v2210 = vor.u32 1.1754944e-38, %v2209
        %v2211 = vsel %vm2208, %v2210, %v2206
        %v2212 = vmul.f32 1.0, %v2211
        %v2213 = vmul.f32 %v2192, %v2069
        %v2214 = vmul.f32 %v2173, %v2193
        %v2215 = vadd.f32 %v2213, %v2214
        %v2216 = vtanh.pop %v2215
        %v2217 = vmul.f32 %v2212, %v2216
        %p2218 = scmp.lt.s32.totalorder %s2082, 8
        %s2219 = scalar_select %p2218, 1, 0
        %v2220 = vstv %s2219
        %vm2221 = vcmp.eq.s32.totalorder %v2220, 1
        %v2222 = vsel %vm2221, %v2217, %v2068
        %v2223 = vsel %vm2221, %v2215, %v2069
        %v2224 = vmax.f32 %v2071, %v2217
        %v2225 = vsel %vm2221, %v2224, %v2071
        %v2226 = vstv %s2082
        %vm2227 = vcmp.eq.s32.totalorder %v796, %v2226
        %v2228 = vsel %vm2227, 1, 0
        %2229 = vset.pattern.permute.xlu0 0
        %2230 = vperm.xlu0 %2229, %v2228
        %v2231 = vpop.permute.xlu0 %2230
        %vm2232 = vcmp.eq.s32.totalorder %v2231, 1
        %v2233 = vsel %vm2232, %v2217, %v2079
        %2234 = vst [vmem:[#allocation3] sm:$0xff] %v2222
        %2235 = vst [vmem:[#allocation4] sm:$0xff] %v2223
        %2236 = vst [vmem:[%s393] sm:$0xff] %v2225
        %2237 = vst [vmem:[%s400] sm:$0xff] %v2233
        %s2238 = sand.u32 %s183, 1
        %s2239 = scalar_lea.sflag [#allocation7], %s2238
        %s2240 = sand.u32 %s183, 1
        %s2241 = smul.addr %s2240, 8
        %s2242 = scalar_lea.vmem [#allocation11], %s2241
        %s2243 = sand.u32 %s209, 1
        %s2244 = scalar_lea.sflag [#allocation13], %s2243
        %s2245 = sand.u32 %s209, 1
        %s2246 = smul.addr %s2245, 8
        %s2247 = scalar_lea.vmem [#allocation12], %s2246
        // Predicated region
        $region57: #{tpu_custom_call.1} parent=39 // pred_check
          %p2248 = pneg %p193
        $region58: #{tpu_custom_call.1} parent=39 // pred_check_branch
          %2250 = sbr.rel (%p2248) target = $region60
        $region59: #{tpu_custom_call.1} parent=39 // pred_region
          %2252 = vsyncadd %s2239, 0
          %s2253 = smul.addr %s34, 8
          %s2254 = scalar_lea.hbm %s5, %s2253
          %s2256 = sshll.u32 %s2242, 4
          %s2257 = int_to_ptr.vmem [resolvable:$true] %s2256
          %s2258 = sshll.u32 %s2254, 4
          %s2259 = int_to_ptr.hbm [resolvable:$true] %s2258
          %2261 = dma.vmem_to_hbm [thread:$0]  %s2257, 128, %s2259, %s2239
        $region60: #{tpu_custom_call.1} parent=39 // pred_fallthru
          _
        // Predicated region
        $region61: #{tpu_custom_call.1} parent=39 // pred_check
          %p2262 = pneg %p219
        $region62: #{tpu_custom_call.1} parent=39 // pred_check_branch
          %2264 = sbr.rel (%p2262) target = $region64
        $region63: #{tpu_custom_call.1} parent=39 // pred_region
          %2266 = vsyncadd %s2244, 0
          %s2267 = smul.addr %s34, 8
          %s2268 = scalar_lea.hbm %s6, %s2267
          %s2270 = sshll.u32 %s2247, 4
          %s2271 = int_to_ptr.vmem [resolvable:$true] %s2270
          %s2272 = sshll.u32 %s2268, 4
          %s2273 = int_to_ptr.hbm [resolvable:$true] %s2272
          %2275 = dma.vmem_to_hbm [thread:$0]  %s2271, 128, %s2273, %s2244
        $region64: #{tpu_custom_call.1} parent=39 // pred_fallthru
          _
      $region40: #{tpu_custom_call.1} parent=5 // pred_fallthru
        _
      %p2276 = scmp.le.s32.totalorder 2, %s25
      // Predicated region
      $region65: #{tpu_custom_call.1} parent=5 // pred_check
        %p2277 = pneg %p2276
      $region66: #{tpu_custom_call.1} parent=5 // pred_check_branch
        %2279 = sbr.rel (%p2277) target = $region68
      $region67: #{tpu_custom_call.1} parent=5 // pred_region
        %s2280 = ssub.s32 %s25, 2
        // Predicated region
        $region69: #{tpu_custom_call.1} parent=67 // pred_check
          %p2281 = pneg %p199
        $region70: #{tpu_custom_call.1} parent=67 // pred_check_branch
          %2283 = sbr.rel (%p2281) target = $region72
        $region71: #{tpu_custom_call.1} parent=67 // pred_region
          %s2284 = sand.u32 %s184, 1
          %s2285 = scalar_lea.sflag [#allocation7], %s2284
          %s2286 = sand.u32 %s184, 1
          %s2287 = smul.addr %s2286, 8
          %s2288 = scalar_lea.vmem [#allocation11], %s2287
          %2290 = dma.done %s2285, 128
        $region72: #{tpu_custom_call.1} parent=67 // pred_fallthru
          _
        // Predicated region
        $region73: #{tpu_custom_call.1} parent=67 // pred_check
          %p2291 = pneg %p225
        $region74: #{tpu_custom_call.1} parent=67 // pred_check_branch
          %2293 = sbr.rel (%p2291) target = $region76
        $region75: #{tpu_custom_call.1} parent=67 // pred_region
          %s2294 = sand.u32 %s210, 1
          %s2295 = scalar_lea.sflag [#allocation13], %s2294
          %s2296 = sand.u32 %s210, 1
          %s2297 = smul.addr %s2296, 8
          %s2298 = scalar_lea.vmem [#allocation12], %s2297
          %2300 = dma.done %s2295, 128
        $region76: #{tpu_custom_call.1} parent=67 // pred_fallthru
          _
      $region68: #{tpu_custom_call.1} parent=5 // pred_fallthru
        _
    $region6: #{tpu_custom_call.1} parent=1 // loop_footer
      %s29 = sadd.s32 1, %s25
    $region7: #{tpu_custom_call.1} parent=1 // loop_footer_branch
      %24 = sbr.rel target = $region3
    $region8: #{tpu_custom_call.1} parent=1 // loop_exit
      _
    %2301 = vsyncpa [#allocation6], 1
    %s2302 = scalar_lea.sflag [#allocation6], 1
    %2303 = vsyncpa %s2302, 1
    %2304 = vsyncpa [#allocation9], 1
    %s2305 = scalar_lea.sflag [#allocation9], 1
    %2306 = vsyncpa %s2305, 1
    %2307 = vsyncpa [#allocation7], 1
    %s2308 = scalar_lea.sflag [#allocation7], 1
    %2309 = vsyncpa %s2308, 1
    %2310 = vsyncpa [#allocation13], 1
    %s2311 = scalar_lea.sflag [#allocation13], 1
    %2312 = vsyncpa %s2311, 1

</llo_original>
